<compile_context>
chip_gen: v5e
topology: v5e:2x2
jax: 0.10.0
libtpu: 0.0.40
codegen_flags: <defaults>
</compile_context>

<pallas_src>
import math

import numpy as np
import jax
import jax.numpy as jnp
from jax.experimental import pallas as pl
from jax.experimental.pallas import tpu as pltpu

# ---------------- config (small, T5-like) ----------------
VOCAB = 100
D_MODEL = 32
N_HEADS = 4
D_KV = 8                      # head dim
INNER = N_HEADS * D_KV        # 32
D_FF = 64
N_LAYERS = 2
SEQ = 8
BATCH = 2
M_ROWS = BATCH * SEQ          # batch folded into rows
NUM_BUCKETS = 32
MAX_DIST = 128
EPS = 1e-6
MASK_VALUE = -1e9             # cross-batch attention mask (block-diagonal fold)


# ---------------- shared math helpers (in-kernel and reference) ----------------
def _rmsnorm(x, w):
    # T5LayerNorm: x * rsqrt(mean(x^2) + eps) * weight   (no mean subtraction)
    var = jnp.mean(x * x, axis=-1, keepdims=True)
    return x * jax.lax.rsqrt(var + EPS) * w


def _gelu_tanh(x):
    # torch.nn.GELU(approximate='tanh')
    c = math.sqrt(2.0 / math.pi)
    return 0.5 * x * (1.0 + jnp.tanh(c * (x + 0.044715 * x * x * x)))


# ---------------- fused encoder kernel ----------------
def encoder_kernel(x_ref, bias_ref, ln_ref, wqkv_ref, wo_ref, wi01_ref, wffo_ref,
                   out_ref):
    """Full T5 encoder stack in one invocation.

    x_ref    : (B*S, D)  f32   hidden after embedding (resident in VMEM throughout)
    bias_ref : (H, B*S, B*S) f32  block-diagonal relative-position bias + -1e9 mask
    ln_ref   : (2L+1, D) f32   packed RMSNorm weights [ln0_0, ln1_0, ..., final]
    wqkv_ref : (L, D, 3*INNER)   bf16   fused Q|K|V projection
    wo_ref   : (L, INNER, D)     bf16   attention output projection
    wi01_ref : (L, D, 2*D_FF)    bf16   fused wi_0|wi_1 gated-FF input projection
    wffo_ref : (L, D_FF, D)      bf16   FF output projection
    out_ref  : (B*S, D)  f32
    """
    h = x_ref[...]                       # (M, D) f32
    biasmask = bias_ref[...]             # (H, M, M) f32 — loaded once, outside loops

    for l in range(N_LAYERS):            # static unroll (L=2)
        # ---------------- self-attention sub-layer ----------------
        xn = _rmsnorm(h, ln_ref[2 * l:2 * l + 1, :])                      # f32
        qkv = jnp.dot(xn.astype(jnp.bfloat16), wqkv_ref[l],
                      preferred_element_type=jnp.float32)                 # (M, 3*INNER)

        # split heads AFTER the fused projection (static lane slices -> (H, M, E))
        q3 = jnp.stack([qkv[:, hh * D_KV:(hh + 1) * D_KV]
                        for hh in range(N_HEADS)], axis=0)
        k3 = jnp.stack([qkv[:, INNER + hh * D_KV:INNER + (hh + 1) * D_KV]
                        for hh in range(N_HEADS)], axis=0)
        v3 = jnp.stack([qkv[:, 2 * INNER + hh * D_KV:2 * INNER + (hh + 1) * D_KV]
                        for hh in range(N_HEADS)], axis=0)

        # T5 does NOT scale scores by 1/sqrt(d_head).  Batch is folded into the
        # sequence axis; biasmask is block-diagonal so cross-batch attention is
        # suppressed (-1e9 -> softmax weight 0).
        scores = jnp.einsum('hqe,hke->hqk',
                            q3.astype(jnp.bfloat16), k3.astype(jnp.bfloat16),
                            preferred_element_type=jnp.float32) + biasmask
        m = jnp.max(scores, axis=-1, keepdims=True)
        e = jnp.exp(scores - m)
        p = e * pl.reciprocal(jnp.sum(e, axis=-1, keepdims=True), approx=True)
        ctx = jnp.einsum('hqk,hke->hqe',
                         p.astype(jnp.bfloat16), v3.astype(jnp.bfloat16),
                         preferred_element_type=jnp.float32)              # (H, M, E)

        # heads concatenated along lanes -> single K=INNER output projection
        ctx2d = jnp.concatenate([ctx[hh] for hh in range(N_HEADS)], axis=-1)  # (M, INNER)
        h = h + jnp.dot(ctx2d.astype(jnp.bfloat16), wo_ref[l],
                        preferred_element_type=jnp.float32)

        # ---------------- gated feed-forward sub-layer ----------------
        xn = _rmsnorm(h, ln_ref[2 * l + 1:2 * l + 2, :])
        h01 = jnp.dot(xn.astype(jnp.bfloat16), wi01_ref[l],
                      preferred_element_type=jnp.float32)                 # (M, 2*D_FF)
        g = _gelu_tanh(h01[:, :D_FF]) * h01[:, D_FF:]                     # f32 elementwise
        h = h + jnp.dot(g.astype(jnp.bfloat16), wffo_ref[l],
                        preferred_element_type=jnp.float32)

    # final layer norm
    out_ref[...] = _rmsnorm(h, ln_ref[2 * N_LAYERS:2 * N_LAYERS + 1, :])


# ---------------- relative position bias (precomputed once, glue JAX) ----------------
def _relative_position_bucket(rel_pos, num_buckets=NUM_BUCKETS, max_distance=MAX_DIST):
    # bidirectional=True (encoder)
    num_buckets //= 2
    rel_buckets = (rel_pos > 0).astype(jnp.int32) * num_buckets
    rel_pos = jnp.abs(rel_pos)
    max_exact = num_buckets // 2
    is_small = rel_pos < max_exact
    safe = jnp.maximum(rel_pos, 1).astype(jnp.float32)
    rel_if_large = max_exact + (
        jnp.log(safe / max_exact) / math.log(max_distance / max_exact)
        * (num_buckets - max_exact)
    ).astype(jnp.int32)
    rel_if_large = jnp.minimum(rel_if_large, num_buckets - 1)
    return rel_buckets + jnp.where(is_small, rel_pos, rel_if_large)


def compute_bias(rel_attn_bias_weight, q_len, k_len):
    # mirrors T5Attention.compute_bias; called ONCE (like the wrapper's precomputed_bias)
    context_position = jnp.arange(q_len)[:, None]
    memory_position = jnp.arange(k_len)[None, :]
    relative_position = memory_position - context_position            # (q, k)
    buckets = _relative_position_bucket(relative_position)            # (q, k)
    values = rel_attn_bias_weight[buckets]                            # (q, k, H)
    return jnp.transpose(values, (2, 0, 1))                           # (H, q, k)


def build_block_bias(bias_hss):
    """(H, S, S) -> (H, B*S, B*S): bias on diagonal blocks, -1e9 off-diagonal.

    Precomputed once host-side so folding batch into the sequence axis inside the
    kernel cannot leak attention across batch elements.
    """
    block = jnp.kron(jnp.eye(BATCH, dtype=jnp.float32),
                     jnp.ones((SEQ, SEQ), jnp.float32))                # (B*S, B*S)
    tiled = jnp.tile(bias_hss, (1, BATCH, BATCH))                      # (H, B*S, B*S)
    return jnp.where(block[None] > 0, tiled, MASK_VALUE).astype(jnp.float32)


# ---------------- parameter init (deterministic, synthetic) ----------------
def init_params(key):
    def nrm(key, shape, scale=0.05):
        return (scale * jax.random.normal(key, shape)).astype(jnp.float32)

    keys = jax.random.split(key, 3 + N_LAYERS)
    params = {
        "embed": nrm(keys[0], (VOCAB, D_MODEL), 1.0),
        "rel_bias": nrm(keys[1], (NUM_BUCKETS, N_HEADS), 0.1),
        "final_ln": jnp.ones((1, D_MODEL), jnp.float32),
        "layers": [],
    }
    for l in range(N_LAYERS):
        lk = jax.random.split(keys[3 + l], 8)
        params["layers"].append({
            "ln0": jnp.ones((1, D_MODEL), jnp.float32),
            "wq": nrm(lk[0], (D_MODEL, INNER)),
            "wk": nrm(lk[1], (D_MODEL, INNER)),
            "wv": nrm(lk[2], (D_MODEL, INNER)),
            "wo": nrm(lk[3], (INNER, D_MODEL)),
            "ln1": jnp.ones((1, D_MODEL), jnp.float32),
            "wi0": nrm(lk[4], (D_MODEL, D_FF)),
            "wi1": nrm(lk[5], (D_MODEL, D_FF)),
            "wff_o": nrm(lk[6], (D_FF, D_MODEL)),
        })
    return params


def prepare_stacked_params(params):
    """Stack per-layer weights, fuse QKV / wi0|wi1, pack LN weights; weights -> bf16.

    Done once, host side (analogous to the wrapper doing its setup in __init__).
    """
    layers = params["layers"]

    def stack(name):
        return jnp.stack([lyr[name] for lyr in layers], axis=0)

    wqkv = jnp.stack([jnp.concatenate([lyr["wq"], lyr["wk"], lyr["wv"]], axis=1)
                      for lyr in layers], axis=0)                      # (L, D, 3*INNER)
    wi01 = jnp.stack([jnp.concatenate([lyr["wi0"], lyr["wi1"]], axis=1)
                      for lyr in layers], axis=0)                      # (L, D, 2*D_FF)

    ln_rows = []
    for lyr in layers:
        ln_rows.append(lyr["ln0"].reshape(D_MODEL))
        ln_rows.append(lyr["ln1"].reshape(D_MODEL))
    ln_rows.append(params["final_ln"].reshape(D_MODEL))
    ln = jnp.stack(ln_rows, axis=0)                                    # (2L+1, D)

    return {
        "embed": params["embed"],
        "ln": ln.astype(jnp.float32),
        "wqkv": wqkv.astype(jnp.bfloat16),
        "wo": stack("wo").astype(jnp.bfloat16),                        # (L, INNER, D)
        "wi01": wi01.astype(jnp.bfloat16),
        "wffo": stack("wff_o").astype(jnp.bfloat16),                   # (L, D_FF, D)
    }


# ---------------- full encoder forward (T5EncoderWrapper.forward) ----------------
@jax.jit
def t5_encoder_forward(stacked, input_ids, biasmask):
    # embedding lookup (glue; the gather stays in XLA)
    hidden = stacked["embed"][input_ids]                               # (B, S, D) f32
    x2d = hidden.reshape(M_ROWS, D_MODEL)                              # fold batch into rows

    out2d = pl.pallas_call(
        encoder_kernel,
        out_shape=jax.ShapeDtypeStruct((M_ROWS, D_MODEL), jnp.float32),
        compiler_params=pltpu.CompilerParams(vmem_limit_bytes=32 * 1024 * 1024),
    )(x2d, biasmask,
      stacked["ln"], stacked["wqkv"], stacked["wo"],
      stacked["wi01"], stacked["wffo"])

    return out2d.reshape(BATCH, SEQ, D_MODEL)                          # last_hidden_state


# ---------------- pure-JAX reference (for correctness check) ----------------
def reference_forward(params, input_ids, bias):
    h = params["embed"][input_ids]                                     # (B, S, D)
    for layer in params["layers"]:
        xn = _rmsnorm(h, layer["ln0"])
        q = xn @ layer["wq"]
        k = xn @ layer["wk"]
        v = xn @ layer["wv"]

        def split(t):
            return t.reshape(BATCH, SEQ, N_HEADS, D_KV).transpose(0, 2, 1, 3)

        qh, kh, vh = split(q), split(k), split(v)
        scores = jnp.einsum('bhqd,bhkd->bhqk', qh, kh) + bias[None]
        p = jax.nn.softmax(scores, axis=-1)
        ctx = jnp.einsum('bhqk,bhkd->bhqd', p, vh)
        ctx = ctx.transpose(0, 2, 1, 3).reshape(BATCH, SEQ, INNER)
        h = h + ctx @ layer["wo"]

        xn = _rmsnorm(h, layer["ln1"])
        g = _gelu_tanh(xn @ layer["wi0"]) * (xn @ layer["wi1"])
        h = h + g @ layer["wff_o"]
    return _rmsnorm(h, params["final_ln"])


if __name__ == "__main__":
    key = jax.random.PRNGKey(0)
    pkey, ikey = jax.random.split(key)
    params = init_params(pkey)
    stacked = prepare_stacked_params(params)                           # once
    bias = compute_bias(params["rel_bias"], SEQ, SEQ)                  # (H, S, S), once
    biasmask = build_block_bias(bias)                                  # (H, B*S, B*S), once
    input_ids = jax.random.randint(ikey, (BATCH, SEQ), 0, VOCAB, dtype=jnp.int32)

    out = t5_encoder_forward(stacked, input_ids, biasmask)
    jax.block_until_ready(out)

    assert out.shape == (BATCH, SEQ, D_MODEL) and out.dtype == jnp.float32
    assert bool(jnp.all(jnp.isfinite(out)))

    ref = reference_forward(params, input_ids, bias)
    np.testing.assert_allclose(np.asarray(out), np.asarray(ref), rtol=1e-2, atol=1e-2)

    print("KERNEL_OK")
</pallas_src>

<mosaic_0001>
module attributes {stable_mosaic.version = 11 : i64} {
  func.func @encoder_kernel(%arg0: memref<16x32xf32, #tpu.memory_space<vmem>>, %arg1: memref<4x16x16xf32, #tpu.memory_space<vmem>>, %arg2: memref<5x32xf32, #tpu.memory_space<vmem>>, %arg3: memref<2x32x96xbf16, #tpu.memory_space<vmem>>, %arg4: memref<2x32x32xbf16, #tpu.memory_space<vmem>>, %arg5: memref<2x32x128xbf16, #tpu.memory_space<vmem>>, %arg6: memref<2x64x32xbf16, #tpu.memory_space<vmem>>, %arg7: memref<16x32xf32, #tpu.memory_space<vmem>>) attributes {dimension_semantics = [], scalar_prefetch = 0 : i64, scratch_operands = 0 : i64, tpu.core_type = #tpu.core_type<tc>} {
    %c0 = arith.constant 0 : index
    %c0_0 = arith.constant 0 : index
    %0 = vector.load %arg0[%c0, %c0_0] : memref<16x32xf32, #tpu.memory_space<vmem>>, vector<16x32xf32>
    %c0_1 = arith.constant 0 : index
    %c0_2 = arith.constant 0 : index
    %c0_3 = arith.constant 0 : index
    %1 = vector.load %arg1[%c0_1, %c0_2, %c0_3] : memref<4x16x16xf32, #tpu.memory_space<vmem>>, vector<4x16x16xf32>
    %c0_4 = arith.constant 0 : index
    %c0_5 = arith.constant 0 : index
    %2 = vector.load %arg2[%c0_4, %c0_5] : memref<5x32xf32, #tpu.memory_space<vmem>>, vector<1x32xf32>
    %3 = arith.mulf %0, %0 : vector<16x32xf32>
    %cst = arith.constant dense<0.000000e+00> : vector<16xf32>
    %4 = vector.multi_reduction <add>, %3, %cst [1] : vector<16x32xf32> to vector<16xf32>
    %5 = vector.shape_cast %4 : vector<16xf32> to vector<16x1xf32>
    %cst_6 = arith.constant 3.200000e+01 : f32
    %6 = vector.broadcast %cst_6 : f32 to vector<16x1xf32>
    %7 = arith.divf %5, %6 : vector<16x1xf32>
    %cst_7 = arith.constant 9.99999997E-7 : f32
    %8 = vector.broadcast %cst_7 : f32 to vector<16x1xf32>
    %9 = arith.addf %7, %8 : vector<16x1xf32>
    %10 = math.rsqrt %9 : vector<16x1xf32>
    %11 = vector.broadcast %10 : vector<16x1xf32> to vector<16x32xf32>
    %12 = arith.mulf %0, %11 : vector<16x32xf32>
    %13 = vector.broadcast %2 : vector<1x32xf32> to vector<16x32xf32>
    %14 = arith.mulf %12, %13 : vector<16x32xf32>
    %15 = arith.truncf %14 : vector<16x32xf32> to vector<16x32xbf16>
    %c0_8 = arith.constant 0 : index
    %c0_9 = arith.constant 0 : index
    %c0_10 = arith.constant 0 : index
    %16 = vector.load %arg3[%c0_8, %c0_9, %c0_10] : memref<2x32x96xbf16, #tpu.memory_space<vmem>>, vector<1x32x96xbf16>
    %17 = vector.shape_cast %16 : vector<1x32x96xbf16> to vector<32x96xbf16>
    %cst_11 = arith.constant dense<0.000000e+00> : vector<16x96xf32>
    %18 = tpu.matmul %15, %17, %cst_11 {dimension_numbers = #tpu.dot_dimension_numbers<[1], [0], [0], [1], [0, 0, 1, 1], [], []>} : vector<16x32xbf16>, vector<32x96xbf16>, vector<16x96xf32> -> vector<16x96xf32>
    %19 = vector.extract_strided_slice %18 {offsets = [0, 0], sizes = [16, 8], strides = [1, 1]} : vector<16x96xf32> to vector<16x8xf32>
    %20 = vector.extract_strided_slice %18 {offsets = [0, 8], sizes = [16, 8], strides = [1, 1]} : vector<16x96xf32> to vector<16x8xf32>
    %21 = vector.extract_strided_slice %18 {offsets = [0, 16], sizes = [16, 8], strides = [1, 1]} : vector<16x96xf32> to vector<16x8xf32>
    %22 = vector.extract_strided_slice %18 {offsets = [0, 24], sizes = [16, 8], strides = [1, 1]} : vector<16x96xf32> to vector<16x8xf32>
    %23 = vector.shape_cast %19 : vector<16x8xf32> to vector<1x16x8xf32>
    %24 = vector.shape_cast %20 : vector<16x8xf32> to vector<1x16x8xf32>
    %25 = vector.shape_cast %21 : vector<16x8xf32> to vector<1x16x8xf32>
    %26 = vector.shape_cast %22 : vector<16x8xf32> to vector<1x16x8xf32>
    %27 = tpu.concatenate %23, %24, %25, %26 in 0 : vector<1x16x8xf32>, vector<1x16x8xf32>, vector<1x16x8xf32>, vector<1x16x8xf32> -> vector<4x16x8xf32>
    %28 = vector.extract_strided_slice %18 {offsets = [0, 32], sizes = [16, 8], strides = [1, 1]} : vector<16x96xf32> to vector<16x8xf32>
    %29 = vector.extract_strided_slice %18 {offsets = [0, 40], sizes = [16, 8], strides = [1, 1]} : vector<16x96xf32> to vector<16x8xf32>
    %30 = vector.extract_strided_slice %18 {offsets = [0, 48], sizes = [16, 8], strides = [1, 1]} : vector<16x96xf32> to vector<16x8xf32>
    %31 = vector.extract_strided_slice %18 {offsets = [0, 56], sizes = [16, 8], strides = [1, 1]} : vector<16x96xf32> to vector<16x8xf32>
    %32 = vector.shape_cast %28 : vector<16x8xf32> to vector<1x16x8xf32>
    %33 = vector.shape_cast %29 : vector<16x8xf32> to vector<1x16x8xf32>
    %34 = vector.shape_cast %30 : vector<16x8xf32> to vector<1x16x8xf32>
    %35 = vector.shape_cast %31 : vector<16x8xf32> to vector<1x16x8xf32>
    %36 = tpu.concatenate %32, %33, %34, %35 in 0 : vector<1x16x8xf32>, vector<1x16x8xf32>, vector<1x16x8xf32>, vector<1x16x8xf32> -> vector<4x16x8xf32>
    %37 = vector.extract_strided_slice %18 {offsets = [0, 64], sizes = [16, 8], strides = [1, 1]} : vector<16x96xf32> to vector<16x8xf32>
    %38 = vector.extract_strided_slice %18 {offsets = [0, 72], sizes = [16, 8], strides = [1, 1]} : vector<16x96xf32> to vector<16x8xf32>
    %39 = vector.extract_strided_slice %18 {offsets = [0, 80], sizes = [16, 8], strides = [1, 1]} : vector<16x96xf32> to vector<16x8xf32>
    %40 = vector.extract_strided_slice %18 {offsets = [0, 88], sizes = [16, 8], strides = [1, 1]} : vector<16x96xf32> to vector<16x8xf32>
    %41 = vector.shape_cast %37 : vector<16x8xf32> to vector<1x16x8xf32>
    %42 = vector.shape_cast %38 : vector<16x8xf32> to vector<1x16x8xf32>
    %43 = vector.shape_cast %39 : vector<16x8xf32> to vector<1x16x8xf32>
    %44 = vector.shape_cast %40 : vector<16x8xf32> to vector<1x16x8xf32>
    %45 = tpu.concatenate %41, %42, %43, %44 in 0 : vector<1x16x8xf32>, vector<1x16x8xf32>, vector<1x16x8xf32>, vector<1x16x8xf32> -> vector<4x16x8xf32>
    %46 = arith.truncf %27 : vector<4x16x8xf32> to vector<4x16x8xbf16>
    %47 = arith.truncf %36 : vector<4x16x8xf32> to vector<4x16x8xbf16>
    "tpu.trace_start"() <{level = 10 : i32, message = "hqe,hke->hqk"}> : () -> ()
    %cst_12 = arith.constant dense<0.000000e+00> : vector<4x16x16xf32>
    %48 = tpu.matmul %46, %47, %cst_12 {dimension_numbers = #tpu.dot_dimension_numbers<[2], [2], [1], [1], [0, 0, 0, 1, 1, 1], [0], [0]>} : vector<4x16x8xbf16>, vector<4x16x8xbf16>, vector<4x16x16xf32> -> vector<4x16x16xf32>
    "tpu.trace_stop"() : () -> ()
    %49 = arith.addf %48, %1 : vector<4x16x16xf32>
    %cst_13 = arith.constant dense<0xFF800000> : vector<4x16xf32>
    %50 = vector.multi_reduction <maximumf>, %49, %cst_13 [2] : vector<4x16x16xf32> to vector<4x16xf32>
    %51 = vector.shape_cast %50 : vector<4x16xf32> to vector<4x16x1xf32>
    %52 = vector.broadcast %51 : vector<4x16x1xf32> to vector<4x16x16xf32>
    %53 = arith.subf %49, %52 : vector<4x16x16xf32>
    %54 = math.exp %53 : vector<4x16x16xf32>
    %cst_14 = arith.constant dense<0.000000e+00> : vector<4x16xf32>
    %55 = vector.multi_reduction <add>, %54, %cst_14 [2] : vector<4x16x16xf32> to vector<4x16xf32>
    %56 = vector.shape_cast %55 : vector<4x16xf32> to vector<4x16x1xf32>
    %57 = tpu.reciprocal %56 {approx = true} : vector<4x16x1xf32> -> vector<4x16x1xf32>
    %58 = vector.broadcast %57 : vector<4x16x1xf32> to vector<4x16x16xf32>
    %59 = arith.mulf %54, %58 : vector<4x16x16xf32>
    %60 = arith.truncf %59 : vector<4x16x16xf32> to vector<4x16x16xbf16>
    %61 = arith.truncf %45 : vector<4x16x8xf32> to vector<4x16x8xbf16>
    "tpu.trace_start"() <{level = 10 : i32, message = "hqk,hke->hqe"}> : () -> ()
    %cst_15 = arith.constant dense<0.000000e+00> : vector<4x16x8xf32>
    %62 = tpu.matmul %60, %61, %cst_15 {dimension_numbers = #tpu.dot_dimension_numbers<[2], [1], [1], [2], [0, 0, 0, 1, 1, 2], [0], [0]>} : vector<4x16x16xbf16>, vector<4x16x8xbf16>, vector<4x16x8xf32> -> vector<4x16x8xf32>
    "tpu.trace_stop"() : () -> ()
    %63 = vector.extract_strided_slice %62 {offsets = [0, 0, 0], sizes = [1, 16, 8], strides = [1, 1, 1]} : vector<4x16x8xf32> to vector<1x16x8xf32>
    %64 = vector.shape_cast %63 : vector<1x16x8xf32> to vector<16x8xf32>
    %65 = vector.extract_strided_slice %62 {offsets = [1, 0, 0], sizes = [1, 16, 8], strides = [1, 1, 1]} : vector<4x16x8xf32> to vector<1x16x8xf32>
    %66 = vector.shape_cast %65 : vector<1x16x8xf32> to vector<16x8xf32>
    %67 = vector.extract_strided_slice %62 {offsets = [2, 0, 0], sizes = [1, 16, 8], strides = [1, 1, 1]} : vector<4x16x8xf32> to vector<1x16x8xf32>
    %68 = vector.shape_cast %67 : vector<1x16x8xf32> to vector<16x8xf32>
    %69 = vector.extract_strided_slice %62 {offsets = [3, 0, 0], sizes = [1, 16, 8], strides = [1, 1, 1]} : vector<4x16x8xf32> to vector<1x16x8xf32>
    %70 = vector.shape_cast %69 : vector<1x16x8xf32> to vector<16x8xf32>
    %71 = tpu.concatenate %64, %66, %68, %70 in 1 : vector<16x8xf32>, vector<16x8xf32>, vector<16x8xf32>, vector<16x8xf32> -> vector<16x32xf32>
    %72 = arith.truncf %71 : vector<16x32xf32> to vector<16x32xbf16>
    %c0_16 = arith.constant 0 : index
    %c0_17 = arith.constant 0 : index
    %c0_18 = arith.constant 0 : index
    %73 = vector.load %arg4[%c0_16, %c0_17, %c0_18] : memref<2x32x32xbf16, #tpu.memory_space<vmem>>, vector<1x32x32xbf16>
    %74 = vector.shape_cast %73 : vector<1x32x32xbf16> to vector<32x32xbf16>
    %cst_19 = arith.constant dense<0.000000e+00> : vector<16x32xf32>
    %75 = tpu.matmul %72, %74, %cst_19 {dimension_numbers = #tpu.dot_dimension_numbers<[1], [0], [0], [1], [0, 0, 1, 1], [], []>} : vector<16x32xbf16>, vector<32x32xbf16>, vector<16x32xf32> -> vector<16x32xf32>
    %76 = arith.addf %0, %75 : vector<16x32xf32>
    %c1 = arith.constant 1 : index
    %c0_20 = arith.constant 0 : index
    %77 = vector.load %arg2[%c1, %c0_20] : memref<5x32xf32, #tpu.memory_space<vmem>>, vector<1x32xf32>
    %78 = arith.mulf %76, %76 : vector<16x32xf32>
    %cst_21 = arith.constant dense<0.000000e+00> : vector<16xf32>
    %79 = vector.multi_reduction <add>, %78, %cst_21 [1] : vector<16x32xf32> to vector<16xf32>
    %80 = vector.shape_cast %79 : vector<16xf32> to vector<16x1xf32>
    %cst_22 = arith.constant 3.200000e+01 : f32
    %81 = vector.broadcast %cst_22 : f32 to vector<16x1xf32>
    %82 = arith.divf %80, %81 : vector<16x1xf32>
    %cst_23 = arith.constant 9.99999997E-7 : f32
    %83 = vector.broadcast %cst_23 : f32 to vector<16x1xf32>
    %84 = arith.addf %82, %83 : vector<16x1xf32>
    %85 = math.rsqrt %84 : vector<16x1xf32>
    %86 = vector.broadcast %85 : vector<16x1xf32> to vector<16x32xf32>
    %87 = arith.mulf %76, %86 : vector<16x32xf32>
    %88 = vector.broadcast %77 : vector<1x32xf32> to vector<16x32xf32>
    %89 = arith.mulf %87, %88 : vector<16x32xf32>
    %90 = arith.truncf %89 : vector<16x32xf32> to vector<16x32xbf16>
    %c0_24 = arith.constant 0 : index
    %c0_25 = arith.constant 0 : index
    %c0_26 = arith.constant 0 : index
    %91 = vector.load %arg5[%c0_24, %c0_25, %c0_26] : memref<2x32x128xbf16, #tpu.memory_space<vmem>>, vector<1x32x128xbf16>
    %92 = vector.shape_cast %91 : vector<1x32x128xbf16> to vector<32x128xbf16>
    %cst_27 = arith.constant dense<0.000000e+00> : vector<16x128xf32>
    %93 = tpu.matmul %90, %92, %cst_27 {dimension_numbers = #tpu.dot_dimension_numbers<[1], [0], [0], [1], [0, 0, 1, 1], [], []>} : vector<16x32xbf16>, vector<32x128xbf16>, vector<16x128xf32> -> vector<16x128xf32>
    %94 = vector.extract_strided_slice %93 {offsets = [0, 0], sizes = [16, 64], strides = [1, 1]} : vector<16x128xf32> to vector<16x64xf32>
    %cst_28 = arith.constant 5.000000e-01 : f32
    %95 = vector.broadcast %cst_28 : f32 to vector<16x64xf32>
    %96 = arith.mulf %95, %94 : vector<16x64xf32>
    %cst_29 = arith.constant 4.471500e-02 : f32
    %97 = vector.broadcast %cst_29 : f32 to vector<16x64xf32>
    %98 = arith.mulf %97, %94 : vector<16x64xf32>
    %99 = arith.mulf %98, %94 : vector<16x64xf32>
    %100 = arith.mulf %99, %94 : vector<16x64xf32>
    %101 = arith.addf %94, %100 : vector<16x64xf32>
    %cst_30 = arith.constant 0.797884583 : f32
    %102 = vector.broadcast %cst_30 : f32 to vector<16x64xf32>
    %103 = arith.mulf %102, %101 : vector<16x64xf32>
    %104 = math.tanh %103 : vector<16x64xf32>
    %cst_31 = arith.constant 1.000000e+00 : f32
    %105 = vector.broadcast %cst_31 : f32 to vector<16x64xf32>
    %106 = arith.addf %105, %104 : vector<16x64xf32>
    %107 = arith.mulf %96, %106 : vector<16x64xf32>
    %108 = vector.extract_strided_slice %93 {offsets = [0, 64], sizes = [16, 64], strides = [1, 1]} : vector<16x128xf32> to vector<16x64xf32>
    %109 = arith.mulf %107, %108 : vector<16x64xf32>
    %110 = arith.truncf %109 : vector<16x64xf32> to vector<16x64xbf16>
    %c0_32 = arith.constant 0 : index
    %c0_33 = arith.constant 0 : index
    %c0_34 = arith.constant 0 : index
    %111 = vector.load %arg6[%c0_32, %c0_33, %c0_34] : memref<2x64x32xbf16, #tpu.memory_space<vmem>>, vector<1x64x32xbf16>
    %112 = vector.shape_cast %111 : vector<1x64x32xbf16> to vector<64x32xbf16>
    %cst_35 = arith.constant dense<0.000000e+00> : vector<16x32xf32>
    %113 = tpu.matmul %110, %112, %cst_35 {dimension_numbers = #tpu.dot_dimension_numbers<[1], [0], [0], [1], [0, 0, 1, 1], [], []>} : vector<16x64xbf16>, vector<64x32xbf16>, vector<16x32xf32> -> vector<16x32xf32>
    %114 = arith.addf %76, %113 : vector<16x32xf32>
    %c2 = arith.constant 2 : index
    %c0_36 = arith.constant 0 : index
    %115 = vector.load %arg2[%c2, %c0_36] : memref<5x32xf32, #tpu.memory_space<vmem>>, vector<1x32xf32>
    %116 = arith.mulf %114, %114 : vector<16x32xf32>
    %cst_37 = arith.constant dense<0.000000e+00> : vector<16xf32>
    %117 = vector.multi_reduction <add>, %116, %cst_37 [1] : vector<16x32xf32> to vector<16xf32>
    %118 = vector.shape_cast %117 : vector<16xf32> to vector<16x1xf32>
    %cst_38 = arith.constant 3.200000e+01 : f32
    %119 = vector.broadcast %cst_38 : f32 to vector<16x1xf32>
    %120 = arith.divf %118, %119 : vector<16x1xf32>
    %cst_39 = arith.constant 9.99999997E-7 : f32
    %121 = vector.broadcast %cst_39 : f32 to vector<16x1xf32>
    %122 = arith.addf %120, %121 : vector<16x1xf32>
    %123 = math.rsqrt %122 : vector<16x1xf32>
    %124 = vector.broadcast %123 : vector<16x1xf32> to vector<16x32xf32>
    %125 = arith.mulf %114, %124 : vector<16x32xf32>
    %126 = vector.broadcast %115 : vector<1x32xf32> to vector<16x32xf32>
    %127 = arith.mulf %125, %126 : vector<16x32xf32>
    %128 = arith.truncf %127 : vector<16x32xf32> to vector<16x32xbf16>
    %c1_40 = arith.constant 1 : index
    %c0_41 = arith.constant 0 : index
    %c0_42 = arith.constant 0 : index
    %129 = vector.load %arg3[%c1_40, %c0_41, %c0_42] : memref<2x32x96xbf16, #tpu.memory_space<vmem>>, vector<1x32x96xbf16>
    %130 = vector.shape_cast %129 : vector<1x32x96xbf16> to vector<32x96xbf16>
    %cst_43 = arith.constant dense<0.000000e+00> : vector<16x96xf32>
    %131 = tpu.matmul %128, %130, %cst_43 {dimension_numbers = #tpu.dot_dimension_numbers<[1], [0], [0], [1], [0, 0, 1, 1], [], []>} : vector<16x32xbf16>, vector<32x96xbf16>, vector<16x96xf32> -> vector<16x96xf32>
    %132 = vector.extract_strided_slice %131 {offsets = [0, 0], sizes = [16, 8], strides = [1, 1]} : vector<16x96xf32> to vector<16x8xf32>
    %133 = vector.extract_strided_slice %131 {offsets = [0, 8], sizes = [16, 8], strides = [1, 1]} : vector<16x96xf32> to vector<16x8xf32>
    %134 = vector.extract_strided_slice %131 {offsets = [0, 16], sizes = [16, 8], strides = [1, 1]} : vector<16x96xf32> to vector<16x8xf32>
    %135 = vector.extract_strided_slice %131 {offsets = [0, 24], sizes = [16, 8], strides = [1, 1]} : vector<16x96xf32> to vector<16x8xf32>
    %136 = vector.shape_cast %132 : vector<16x8xf32> to vector<1x16x8xf32>
    %137 = vector.shape_cast %133 : vector<16x8xf32> to vector<1x16x8xf32>
    %138 = vector.shape_cast %134 : vector<16x8xf32> to vector<1x16x8xf32>
    %139 = vector.shape_cast %135 : vector<16x8xf32> to vector<1x16x8xf32>
    %140 = tpu.concatenate %136, %137, %138, %139 in 0 : vector<1x16x8xf32>, vector<1x16x8xf32>, vector<1x16x8xf32>, vector<1x16x8xf32> -> vector<4x16x8xf32>
    %141 = vector.extract_strided_slice %131 {offsets = [0, 32], sizes = [16, 8], strides = [1, 1]} : vector<16x96xf32> to vector<16x8xf32>
    %142 = vector.extract_strided_slice %131 {offsets = [0, 40], sizes = [16, 8], strides = [1, 1]} : vector<16x96xf32> to vector<16x8xf32>
    %143 = vector.extract_strided_slice %131 {offsets = [0, 48], sizes = [16, 8], strides = [1, 1]} : vector<16x96xf32> to vector<16x8xf32>
    %144 = vector.extract_strided_slice %131 {offsets = [0, 56], sizes = [16, 8], strides = [1, 1]} : vector<16x96xf32> to vector<16x8xf32>
    %145 = vector.shape_cast %141 : vector<16x8xf32> to vector<1x16x8xf32>
    %146 = vector.shape_cast %142 : vector<16x8xf32> to vector<1x16x8xf32>
    %147 = vector.shape_cast %143 : vector<16x8xf32> to vector<1x16x8xf32>
    %148 = vector.shape_cast %144 : vector<16x8xf32> to vector<1x16x8xf32>
    %149 = tpu.concatenate %145, %146, %147, %148 in 0 : vector<1x16x8xf32>, vector<1x16x8xf32>, vector<1x16x8xf32>, vector<1x16x8xf32> -> vector<4x16x8xf32>
    %150 = vector.extract_strided_slice %131 {offsets = [0, 64], sizes = [16, 8], strides = [1, 1]} : vector<16x96xf32> to vector<16x8xf32>
    %151 = vector.extract_strided_slice %131 {offsets = [0, 72], sizes = [16, 8], strides = [1, 1]} : vector<16x96xf32> to vector<16x8xf32>
    %152 = vector.extract_strided_slice %131 {offsets = [0, 80], sizes = [16, 8], strides = [1, 1]} : vector<16x96xf32> to vector<16x8xf32>
    %153 = vector.extract_strided_slice %131 {offsets = [0, 88], sizes = [16, 8], strides = [1, 1]} : vector<16x96xf32> to vector<16x8xf32>
    %154 = vector.shape_cast %150 : vector<16x8xf32> to vector<1x16x8xf32>
    %155 = vector.shape_cast %151 : vector<16x8xf32> to vector<1x16x8xf32>
    %156 = vector.shape_cast %152 : vector<16x8xf32> to vector<1x16x8xf32>
    %157 = vector.shape_cast %153 : vector<16x8xf32> to vector<1x16x8xf32>
    %158 = tpu.concatenate %154, %155, %156, %157 in 0 : vector<1x16x8xf32>, vector<1x16x8xf32>, vector<1x16x8xf32>, vector<1x16x8xf32> -> vector<4x16x8xf32>
    %159 = arith.truncf %140 : vector<4x16x8xf32> to vector<4x16x8xbf16>
    %160 = arith.truncf %149 : vector<4x16x8xf32> to vector<4x16x8xbf16>
    "tpu.trace_start"() <{level = 10 : i32, message = "hqe,hke->hqk"}> : () -> ()
    %cst_44 = arith.constant dense<0.000000e+00> : vector<4x16x16xf32>
    %161 = tpu.matmul %159, %160, %cst_44 {dimension_numbers = #tpu.dot_dimension_numbers<[2], [2], [1], [1], [0, 0, 0, 1, 1, 1], [0], [0]>} : vector<4x16x8xbf16>, vector<4x16x8xbf16>, vector<4x16x16xf32> -> vector<4x16x16xf32>
    "tpu.trace_stop"() : () -> ()
    %162 = arith.addf %161, %1 : vector<4x16x16xf32>
    %cst_45 = arith.constant dense<0xFF800000> : vector<4x16xf32>
    %163 = vector.multi_reduction <maximumf>, %162, %cst_45 [2] : vector<4x16x16xf32> to vector<4x16xf32>
    %164 = vector.shape_cast %163 : vector<4x16xf32> to vector<4x16x1xf32>
    %165 = vector.broadcast %164 : vector<4x16x1xf32> to vector<4x16x16xf32>
    %166 = arith.subf %162, %165 : vector<4x16x16xf32>
    %167 = math.exp %166 : vector<4x16x16xf32>
    %cst_46 = arith.constant dense<0.000000e+00> : vector<4x16xf32>
    %168 = vector.multi_reduction <add>, %167, %cst_46 [2] : vector<4x16x16xf32> to vector<4x16xf32>
    %169 = vector.shape_cast %168 : vector<4x16xf32> to vector<4x16x1xf32>
    %170 = tpu.reciprocal %169 {approx = true} : vector<4x16x1xf32> -> vector<4x16x1xf32>
    %171 = vector.broadcast %170 : vector<4x16x1xf32> to vector<4x16x16xf32>
    %172 = arith.mulf %167, %171 : vector<4x16x16xf32>
    %173 = arith.truncf %172 : vector<4x16x16xf32> to vector<4x16x16xbf16>
    %174 = arith.truncf %158 : vector<4x16x8xf32> to vector<4x16x8xbf16>
    "tpu.trace_start"() <{level = 10 : i32, message = "hqk,hke->hqe"}> : () -> ()
    %cst_47 = arith.constant dense<0.000000e+00> : vector<4x16x8xf32>
    %175 = tpu.matmul %173, %174, %cst_47 {dimension_numbers = #tpu.dot_dimension_numbers<[2], [1], [1], [2], [0, 0, 0, 1, 1, 2], [0], [0]>} : vector<4x16x16xbf16>, vector<4x16x8xbf16>, vector<4x16x8xf32> -> vector<4x16x8xf32>
    "tpu.trace_stop"() : () -> ()
    %176 = vector.extract_strided_slice %175 {offsets = [0, 0, 0], sizes = [1, 16, 8], strides = [1, 1, 1]} : vector<4x16x8xf32> to vector<1x16x8xf32>
    %177 = vector.shape_cast %176 : vector<1x16x8xf32> to vector<16x8xf32>
    %178 = vector.extract_strided_slice %175 {offsets = [1, 0, 0], sizes = [1, 16, 8], strides = [1, 1, 1]} : vector<4x16x8xf32> to vector<1x16x8xf32>
    %179 = vector.shape_cast %178 : vector<1x16x8xf32> to vector<16x8xf32>
    %180 = vector.extract_strided_slice %175 {offsets = [2, 0, 0], sizes = [1, 16, 8], strides = [1, 1, 1]} : vector<4x16x8xf32> to vector<1x16x8xf32>
    %181 = vector.shape_cast %180 : vector<1x16x8xf32> to vector<16x8xf32>
    %182 = vector.extract_strided_slice %175 {offsets = [3, 0, 0], sizes = [1, 16, 8], strides = [1, 1, 1]} : vector<4x16x8xf32> to vector<1x16x8xf32>
    %183 = vector.shape_cast %182 : vector<1x16x8xf32> to vector<16x8xf32>
    %184 = tpu.concatenate %177, %179, %181, %183 in 1 : vector<16x8xf32>, vector<16x8xf32>, vector<16x8xf32>, vector<16x8xf32> -> vector<16x32xf32>
    %185 = arith.truncf %184 : vector<16x32xf32> to vector<16x32xbf16>
    %c1_48 = arith.constant 1 : index
    %c0_49 = arith.constant 0 : index
    %c0_50 = arith.constant 0 : index
    %186 = vector.load %arg4[%c1_48, %c0_49, %c0_50] : memref<2x32x32xbf16, #tpu.memory_space<vmem>>, vector<1x32x32xbf16>
    %187 = vector.shape_cast %186 : vector<1x32x32xbf16> to vector<32x32xbf16>
    %cst_51 = arith.constant dense<0.000000e+00> : vector<16x32xf32>
    %188 = tpu.matmul %185, %187, %cst_51 {dimension_numbers = #tpu.dot_dimension_numbers<[1], [0], [0], [1], [0, 0, 1, 1], [], []>} : vector<16x32xbf16>, vector<32x32xbf16>, vector<16x32xf32> -> vector<16x32xf32>
    %189 = arith.addf %114, %188 : vector<16x32xf32>
    %c3 = arith.constant 3 : index
    %c0_52 = arith.constant 0 : index
    %190 = vector.load %arg2[%c3, %c0_52] : memref<5x32xf32, #tpu.memory_space<vmem>>, vector<1x32xf32>
    %191 = arith.mulf %189, %189 : vector<16x32xf32>
    %cst_53 = arith.constant dense<0.000000e+00> : vector<16xf32>
    %192 = vector.multi_reduction <add>, %191, %cst_53 [1] : vector<16x32xf32> to vector<16xf32>
    %193 = vector.shape_cast %192 : vector<16xf32> to vector<16x1xf32>
    %cst_54 = arith.constant 3.200000e+01 : f32
    %194 = vector.broadcast %cst_54 : f32 to vector<16x1xf32>
    %195 = arith.divf %193, %194 : vector<16x1xf32>
    %cst_55 = arith.constant 9.99999997E-7 : f32
    %196 = vector.broadcast %cst_55 : f32 to vector<16x1xf32>
    %197 = arith.addf %195, %196 : vector<16x1xf32>
    %198 = math.rsqrt %197 : vector<16x1xf32>
    %199 = vector.broadcast %198 : vector<16x1xf32> to vector<16x32xf32>
    %200 = arith.mulf %189, %199 : vector<16x32xf32>
    %201 = vector.broadcast %190 : vector<1x32xf32> to vector<16x32xf32>
    %202 = arith.mulf %200, %201 : vector<16x32xf32>
    %203 = arith.truncf %202 : vector<16x32xf32> to vector<16x32xbf16>
    %c1_56 = arith.constant 1 : index
    %c0_57 = arith.constant 0 : index
    %c0_58 = arith.constant 0 : index
    %204 = vector.load %arg5[%c1_56, %c0_57, %c0_58] : memref<2x32x128xbf16, #tpu.memory_space<vmem>>, vector<1x32x128xbf16>
    %205 = vector.shape_cast %204 : vector<1x32x128xbf16> to vector<32x128xbf16>
    %cst_59 = arith.constant dense<0.000000e+00> : vector<16x128xf32>
    %206 = tpu.matmul %203, %205, %cst_59 {dimension_numbers = #tpu.dot_dimension_numbers<[1], [0], [0], [1], [0, 0, 1, 1], [], []>} : vector<16x32xbf16>, vector<32x128xbf16>, vector<16x128xf32> -> vector<16x128xf32>
    %207 = vector.extract_strided_slice %206 {offsets = [0, 0], sizes = [16, 64], strides = [1, 1]} : vector<16x128xf32> to vector<16x64xf32>
    %cst_60 = arith.constant 5.000000e-01 : f32
    %208 = vector.broadcast %cst_60 : f32 to vector<16x64xf32>
    %209 = arith.mulf %208, %207 : vector<16x64xf32>
    %cst_61 = arith.constant 4.471500e-02 : f32
    %210 = vector.broadcast %cst_61 : f32 to vector<16x64xf32>
    %211 = arith.mulf %210, %207 : vector<16x64xf32>
    %212 = arith.mulf %211, %207 : vector<16x64xf32>
    %213 = arith.mulf %212, %207 : vector<16x64xf32>
    %214 = arith.addf %207, %213 : vector<16x64xf32>
    %cst_62 = arith.constant 0.797884583 : f32
    %215 = vector.broadcast %cst_62 : f32 to vector<16x64xf32>
    %216 = arith.mulf %215, %214 : vector<16x64xf32>
    %217 = math.tanh %216 : vector<16x64xf32>
    %cst_63 = arith.constant 1.000000e+00 : f32
    %218 = vector.broadcast %cst_63 : f32 to vector<16x64xf32>
    %219 = arith.addf %218, %217 : vector<16x64xf32>
    %220 = arith.mulf %209, %219 : vector<16x64xf32>
    %221 = vector.extract_strided_slice %206 {offsets = [0, 64], sizes = [16, 64], strides = [1, 1]} : vector<16x128xf32> to vector<16x64xf32>
    %222 = arith.mulf %220, %221 : vector<16x64xf32>
    %223 = arith.truncf %222 : vector<16x64xf32> to vector<16x64xbf16>
    %c1_64 = arith.constant 1 : index
    %c0_65 = arith.constant 0 : index
    %c0_66 = arith.constant 0 : index
    %224 = vector.load %arg6[%c1_64, %c0_65, %c0_66] : memref<2x64x32xbf16, #tpu.memory_space<vmem>>, vector<1x64x32xbf16>
    %225 = vector.shape_cast %224 : vector<1x64x32xbf16> to vector<64x32xbf16>
    %cst_67 = arith.constant dense<0.000000e+00> : vector<16x32xf32>
    %226 = tpu.matmul %223, %225, %cst_67 {dimension_numbers = #tpu.dot_dimension_numbers<[1], [0], [0], [1], [0, 0, 1, 1], [], []>} : vector<16x64xbf16>, vector<64x32xbf16>, vector<16x32xf32> -> vector<16x32xf32>
    %227 = arith.addf %189, %226 : vector<16x32xf32>
    %c4 = arith.constant 4 : index
    %c0_68 = arith.constant 0 : index
    %228 = vector.load %arg2[%c4, %c0_68] : memref<5x32xf32, #tpu.memory_space<vmem>>, vector<1x32xf32>
    %229 = arith.mulf %227, %227 : vector<16x32xf32>
    %cst_69 = arith.constant dense<0.000000e+00> : vector<16xf32>
    %230 = vector.multi_reduction <add>, %229, %cst_69 [1] : vector<16x32xf32> to vector<16xf32>
    %231 = vector.shape_cast %230 : vector<16xf32> to vector<16x1xf32>
    %cst_70 = arith.constant 3.200000e+01 : f32
    %232 = vector.broadcast %cst_70 : f32 to vector<16x1xf32>
    %233 = arith.divf %231, %232 : vector<16x1xf32>
    %cst_71 = arith.constant 9.99999997E-7 : f32
    %234 = vector.broadcast %cst_71 : f32 to vector<16x1xf32>
    %235 = arith.addf %233, %234 : vector<16x1xf32>
    %236 = math.rsqrt %235 : vector<16x1xf32>
    %237 = vector.broadcast %236 : vector<16x1xf32> to vector<16x32xf32>
    %238 = arith.mulf %227, %237 : vector<16x32xf32>
    %239 = vector.broadcast %228 : vector<1x32xf32> to vector<16x32xf32>
    %240 = arith.mulf %238, %239 : vector<16x32xf32>
    %c0_72 = arith.constant 0 : index
    %c0_73 = arith.constant 0 : index
    %241 = vector.load %arg7[%c0_72, %c0_73] : memref<16x32xf32, #tpu.memory_space<vmem>>, vector<16x32xf32>
    tpu.vector_store %arg7[%c0_72, %c0_73], %240 {strides = array<i32>} : memref<16x32xf32, #tpu.memory_space<vmem>>, vector<16x32xf32>,
    return
  }
}

</mosaic_0001>

<llo_original>
// kernel: t5_encoder_forward.1
$region0: #{t5_encoder_forward.1}
  #allocation0 [shape = 'u32[]', space=smem, size = 0x4, offset = 0x4, fixed_abs, tag = 'smem constant byte address 0x4 - core index']
  #allocation1 [shape = 'u32[72,128]{1,0:T(1,128)}', space=vmem, size = 0x9000, scoped, tag = 'internal scratch']
  %s0 = inlined_call_operand.vmem [shape: f32[16,32], index: 0, kind: input, shape index: {}]
  %s1 = inlined_call_operand.vmem [shape: f32[4,16,16], index: 1, kind: input, shape index: {}]
  %s2 = inlined_call_operand.vmem [shape: f32[5,32], index: 2, kind: input, shape index: {}]
  %s3 = inlined_call_operand.vmem [shape: bf16[2,32,96], index: 3, kind: input, shape index: {}]
  %s4 = inlined_call_operand.vmem [shape: bf16[2,32,32], index: 4, kind: input, shape index: {}]
  %s5 = inlined_call_operand.vmem [shape: bf16[2,32,128], index: 5, kind: input, shape index: {}]
  %s6 = inlined_call_operand.vmem [shape: bf16[2,64,32], index: 6, kind: input, shape index: {}]
  %s7 = inlined_call_operand.hbm [shape: f32[16,32], index: 7, kind: output, shape index: {}]
  %s8 = sld [smem:[#allocation0]]
  $region38: #{t5_encoder_forward.1} parent=0
    _
  %s10 = ssub.s32 1, %s8
  %s11 = scalar_select 0, %s10, %s8
  $region1: #{t5_encoder_forward.1} parent=0
    #allocation2 [shape = 'u8[8192]{0}', space=vmem, size = 0x2000, scoped, tag = 'output window, operand 0, single buffered']
    #allocation3 [shape = 's32[1]{0}', space=sflag, size = 0x4, scoped, tag = 'scoped memory for t5_encoder_forward.1']
    %12 = vsyncpa [#allocation3], 0
    // Predicated region
    $region2: #{t5_encoder_forward.1} parent=1 // pred_check
      _
    $region3: #{t5_encoder_forward.1} parent=1 // pred_check_branch
      %14 = sbr.rel (0) target = $region5
    $region4: #{t5_encoder_forward.1} parent=1 // pred_region
      _
    $region5: #{t5_encoder_forward.1} parent=1 // pred_fallthru
      _
    // Predicated region
    $region6: #{t5_encoder_forward.1} parent=1 // pred_check
      _
    $region7: #{t5_encoder_forward.1} parent=1 // pred_check_branch
      %16 = sbr.rel (0) target = $region9
    $region8: #{t5_encoder_forward.1} parent=1 // pred_region
      _
    $region9: #{t5_encoder_forward.1} parent=1 // pred_fallthru
      _
    // Predicated region
    $region10: #{t5_encoder_forward.1} parent=1 // pred_check
      _
    $region11: #{t5_encoder_forward.1} parent=1 // pred_check_branch
      %18 = sbr.rel (0) target = $region13
    $region12: #{t5_encoder_forward.1} parent=1 // pred_region
      _
    $region13: #{t5_encoder_forward.1} parent=1 // pred_fallthru
      _
    // Predicated region
    $region14: #{t5_encoder_forward.1} parent=1 // pred_check
      _
    $region15: #{t5_encoder_forward.1} parent=1 // pred_check_branch
      %20 = sbr.rel (0) target = $region17
    $region16: #{t5_encoder_forward.1} parent=1 // pred_region
      _
    $region17: #{t5_encoder_forward.1} parent=1 // pred_fallthru
      _
    // Predicated region
    $region18: #{t5_encoder_forward.1} parent=1 // pred_check
      _
    $region19: #{t5_encoder_forward.1} parent=1 // pred_check_branch
      %22 = sbr.rel (0) target = $region21
    $region20: #{t5_encoder_forward.1} parent=1 // pred_region
      _
    $region21: #{t5_encoder_forward.1} parent=1 // pred_fallthru
      _
    // Predicated region
    $region22: #{t5_encoder_forward.1} parent=1 // pred_check
      _
    $region23: #{t5_encoder_forward.1} parent=1 // pred_check_branch
      %24 = sbr.rel (0) target = $region25
    $region24: #{t5_encoder_forward.1} parent=1 // pred_region
      _
    $region25: #{t5_encoder_forward.1} parent=1 // pred_fallthru
      _
    // Predicated region
    $region26: #{t5_encoder_forward.1} parent=1 // pred_check
      _
    $region27: #{t5_encoder_forward.1} parent=1 // pred_check_branch
      %26 = sbr.rel (0) target = $region29
    $region28: #{t5_encoder_forward.1} parent=1 // pred_region
      _
    $region29: #{t5_encoder_forward.1} parent=1 // pred_fallthru
      _
    %v28 = vld [vmem:[%s0] sm:$0xff]
    %v29 = vld [vmem:[%s0 + $0x8] sm:$0xff]
    %v30 = vld [vmem:[%s1] sm:$0xff]
    %v31 = vld [vmem:[%s1 + $0x8] sm:$0xff]
    %v32 = vld [vmem:[%s1 + $0x10] sm:$0xff]
    %v33 = vld [vmem:[%s1 + $0x18] sm:$0xff]
    %v34 = vld [vmem:[%s1 + $0x20] sm:$0xff]
    %v35 = vld [vmem:[%s1 + $0x28] sm:$0xff]
    %v36 = vld [vmem:[%s1 + $0x30] sm:$0xff]
    %v37 = vld [vmem:[%s1 + $0x38] sm:$0xff]
    %v38 = vld [vmem:[%s2] sm:$0x1]
    %v39 = vmul.f32 %v28, %v28
    %v40 = vmul.f32 %v29, %v29
    %vm41 = vcmask 261120
    %v42 = vsel %vm41, %v39, 0.0
    %43 = vadd.xlane.f32.xlu0 %v42
    %v44 = vpop.xlane.xlu0 %43
    %v45 = vsel %vm41, %v40, 0.0
    %46 = vadd.xlane.f32.xlu0 %v45
    %v47 = vpop.xlane.xlu0 %46
    %v48 = vrcp.pop 32.0
    %v49 = vmul.f32 32.0, %v48
    %v50 = vsub.f32 1.0, %v49
    %v51 = vmul.f32 %v48, %v50
    %v52 = vadd.f32 %v48, %v51
    %vm53 = vweird.f32 %v48
    %v54 = vsel %vm53, %v48, %v52
    %v55 = vmul.f32 %v44, %v54
    %v56 = vmul.f32 %v47, %v54
    %v57 = vadd.f32 %v55, 1e-06
    %v58 = vadd.f32 %v56, 1e-06
    %v59 = vrsqrt.pop %v57
    %v60 = vmul.f32 %v59, %v57
    %v61 = vmul.f32 %v60, %v59
    %v62 = vmul.f32 0.5, %v61
    %v63 = vsub.f32 1.5, %v62
    %v64 = vmul.f32 %v59, %v63
    %vm65 = vweird.f32 %v57
    %vm66 = vweird.f32 %v59
    %vm67 = vmor %vm65, %vm66
    %v68 = vsel %vm67, %v59, %v64
    %v69 = vrsqrt.pop %v58
    %v70 = vmul.f32 %v69, %v58
    %v71 = vmul.f32 %v70, %v69
    %v72 = vmul.f32 0.5, %v71
    %v73 = vsub.f32 1.5, %v72
    %v74 = vmul.f32 %v69, %v73
    %vm75 = vweird.f32 %v58
    %vm76 = vweird.f32 %v69
    %vm77 = vmor %vm75, %vm76
    %v78 = vsel %vm77, %v69, %v74
    %v79 = vmul.f32 %v28, %v68
    %v80 = vmul.f32 %v29, %v78
    %v81 = vperm.slane %v38, 0
    %v82 = vmul.f32 %v79, %v81
    %v83 = vmul.f32 %v80, %v81
    %v84 = vpack.c.bf16 %v83, %v82
    %v85 = vld [vmem:[%s3] sm:$0xf]
    %v86 = vld [vmem:[%s3 + $0x4] sm:$0xf]
    %v87 = vld [vmem:[%s3 + $0x8] sm:$0xf]
    %v88 = vld [vmem:[%s3 + $0xc] sm:$0xf]
    %v93 = vunpack.c.l.b16 %v85
    %v94 = vunpack.c.l.b16 %v86
    %v95 = vunpack.c.l.b16 %v87
    %v96 = vunpack.c.l.b16 %v88
    %v97 = vpack.c.b16 %v94, %v93
    %v98 = vpack.c.b16 %v96, %v95
    %v102 = vsel %vm41, %v84, 0
    %104 = vmatpush.bf16.msra.mxu0 0
    %105 = vmatpush.bf16.msra.mxu0 0
    %106 = vmatpush.bf16.msra.mxu0 0
    %107 = vmatpush.bf16.msra.mxu0 0
    %108 = vmatpush.bf16.msra.mxu0 0
    %109 = vmatpush.bf16.msra.mxu0 0
    %110 = vmatpush.bf16.msra.mxu0 %v98
    %111 = vmatpush.bf16.msra.mxu0 %v97
    %112 = vmatmul.bf16.gmra.mxu0 %v102
    %v113 = vpop.f32.mrf.mxu0
    %v114 = vadd.f32 0.0, %v113
    %v115 = vpop.f32.mrf.mxu0
    %v116 = vadd.f32 0.0, %v115
    %117 = vdwg.mxu0
    %120 = vrot.lane.b32.xlu0 %v114, 120
    %v121 = vpop.permute.xlu0 %120
    %122 = vrot.lane.b32.xlu0 %v116, 120
    %v123 = vpop.permute.xlu0 %122
    %126 = vrot.lane.b32.xlu0 %v114, 112
    %v127 = vpop.permute.xlu0 %126
    %128 = vrot.lane.b32.xlu0 %v116, 112
    %v129 = vpop.permute.xlu0 %128
    %132 = vrot.lane.b32.xlu0 %v114, 104
    %v133 = vpop.permute.xlu0 %132
    %134 = vrot.lane.b32.xlu0 %v116, 104
    %v135 = vpop.permute.xlu0 %134
    %v138 = vpack.c.bf16 %v114, %v114
    %v139 = vpack.c.bf16 %v116, %v116
    %v140 = vpack.c.bf16 %v121, %v121
    %v141 = vpack.c.bf16 %v123, %v123
    %v142 = vpack.c.bf16 %v127, %v127
    %v143 = vpack.c.bf16 %v129, %v129
    %v144 = vpack.c.bf16 %v133, %v133
    %v145 = vpack.c.bf16 %v135, %v135
    %v148 = vunpack.c.l.b16 %v138
    %v149 = vunpack.c.l.b16 %v139
    %v150 = vpack.c.b16 %v149, %v148
    %151 = vrot.lane.b32.xlu0 %v150, 96
    %v152 = vpop.permute.xlu0 %151
    %vm153 = vcmask 64512
    %v155 = vsel %vm153, %v150, 0
    %v158 = vsel %vm153, %v152, 0
    %160 = vmatpush.bf16.xpose.msra.mxu0 0
    %161 = vmatpush.bf16.xpose.msra.mxu0 0
    %162 = vmatpush.bf16.xpose.msra.mxu0 0
    %163 = vmatpush.bf16.xpose.msra.mxu0 0
    %164 = vmatpush.bf16.xpose.msra.mxu0 0
    %165 = vmatpush.bf16.xpose.msra.mxu0 0
    %166 = vmatpush.bf16.xpose.msra.mxu0 0
    %167 = vmatpush.bf16.xpose.msra.mxu0 %v158
    %168 = vmatmul.bf16.gmra.mxu0 %v155
    %v169 = vpop.f32.mrf.mxu0
    %v170 = vadd.f32 %v30, %v169
    %v171 = vpop.f32.mrf.mxu0
    %v172 = vadd.f32 %v31, %v171
    %173 = vdwg.mxu0
    %v176 = vunpack.c.l.b16 %v140
    %v177 = vunpack.c.l.b16 %v141
    %v178 = vpack.c.b16 %v177, %v176
    %179 = vrot.lane.b32.xlu0 %v178, 96
    %v180 = vpop.permute.xlu0 %179
    %v182 = vsel %vm153, %v178, 0
    %v185 = vsel %vm153, %v180, 0
    %187 = vmatpush.bf16.xpose.msra.mxu0 0
    %188 = vmatpush.bf16.xpose.msra.mxu0 0
    %189 = vmatpush.bf16.xpose.msra.mxu0 0
    %190 = vmatpush.bf16.xpose.msra.mxu0 0
    %191 = vmatpush.bf16.xpose.msra.mxu0 0
    %192 = vmatpush.bf16.xpose.msra.mxu0 0
    %193 = vmatpush.bf16.xpose.msra.mxu0 0
    %194 = vmatpush.bf16.xpose.msra.mxu0 %v185
    %195 = vmatmul.bf16.gmra.mxu0 %v182
    %v196 = vpop.f32.mrf.mxu0
    %v197 = vadd.f32 %v32, %v196
    %v198 = vpop.f32.mrf.mxu0
    %v199 = vadd.f32 %v33, %v198
    %200 = vdwg.mxu0
    %v203 = vunpack.c.l.b16 %v142
    %v204 = vunpack.c.l.b16 %v143
    %v205 = vpack.c.b16 %v204, %v203
    %206 = vrot.lane.b32.xlu0 %v205, 96
    %v207 = vpop.permute.xlu0 %206
    %v209 = vsel %vm153, %v205, 0
    %v212 = vsel %vm153, %v207, 0
    %214 = vmatpush.bf16.xpose.msra.mxu0 0
    %215 = vmatpush.bf16.xpose.msra.mxu0 0
    %216 = vmatpush.bf16.xpose.msra.mxu0 0
    %217 = vmatpush.bf16.xpose.msra.mxu0 0
    %218 = vmatpush.bf16.xpose.msra.mxu0 0
    %219 = vmatpush.bf16.xpose.msra.mxu0 0
    %220 = vmatpush.bf16.xpose.msra.mxu0 0
    %221 = vmatpush.bf16.xpose.msra.mxu0 %v212
    %222 = vmatmul.bf16.gmra.mxu0 %v209
    %v223 = vpop.f32.mrf.mxu0
    %v224 = vadd.f32 %v34, %v223
    %v225 = vpop.f32.mrf.mxu0
    %v226 = vadd.f32 %v35, %v225
    %227 = vdwg.mxu0
    %v230 = vunpack.c.l.b16 %v144
    %v231 = vunpack.c.l.b16 %v145
    %v232 = vpack.c.b16 %v231, %v230
    %233 = vrot.lane.b32.xlu0 %v232, 96
    %v234 = vpop.permute.xlu0 %233
    %v236 = vsel %vm153, %v232, 0
    %v239 = vsel %vm153, %v234, 0
    %241 = vmatpush.bf16.xpose.msra.mxu0 0
    %242 = vmatpush.bf16.xpose.msra.mxu0 0
    %243 = vmatpush.bf16.xpose.msra.mxu0 0
    %244 = vmatpush.bf16.xpose.msra.mxu0 0
    %245 = vmatpush.bf16.xpose.msra.mxu0 0
    %246 = vmatpush.bf16.xpose.msra.mxu0 0
    %247 = vmatpush.bf16.xpose.msra.mxu0 0
    %248 = vmatpush.bf16.xpose.msra.mxu0 %v239
    %249 = vmatmul.bf16.gmra.mxu0 %v236
    %v250 = vpop.f32.mrf.mxu0
    %v251 = vadd.f32 %v36, %v250
    %v252 = vpop.f32.mrf.mxu0
    %v253 = vadd.f32 %v37, %v252
    %254 = vdwg.mxu0
    %vm255 = vcmask 130048
    %v256 = vsel %vm255, %v170, -inf
    %257 = vmax.xlane.f32.xlu0 %v256
    %v258 = vpop.xlane.xlu0 %257
    %v259 = vsel %vm255, %v172, -inf
    %260 = vmax.xlane.f32.xlu0 %v259
    %v261 = vpop.xlane.xlu0 %260
    %v262 = vsel %vm255, %v197, -inf
    %263 = vmax.xlane.f32.xlu0 %v262
    %v264 = vpop.xlane.xlu0 %263
    %v265 = vsel %vm255, %v199, -inf
    %266 = vmax.xlane.f32.xlu0 %v265
    %v267 = vpop.xlane.xlu0 %266
    %v268 = vsel %vm255, %v224, -inf
    %269 = vmax.xlane.f32.xlu0 %v268
    %v270 = vpop.xlane.xlu0 %269
    %v271 = vsel %vm255, %v226, -inf
    %272 = vmax.xlane.f32.xlu0 %v271
    %v273 = vpop.xlane.xlu0 %272
    %v274 = vsel %vm255, %v251, -inf
    %275 = vmax.xlane.f32.xlu0 %v274
    %v276 = vpop.xlane.xlu0 %275
    %v277 = vsel %vm255, %v253, -inf
    %278 = vmax.xlane.f32.xlu0 %v277
    %v279 = vpop.xlane.xlu0 %278
    %v280 = vsub.f32 %v170, %v258
    %v281 = vsub.f32 %v172, %v261
    %v282 = vsub.f32 %v197, %v264
    %v283 = vsub.f32 %v199, %v267
    %v284 = vsub.f32 %v224, %v270
    %v285 = vsub.f32 %v226, %v273
    %v286 = vsub.f32 %v251, %v276
    %v287 = vsub.f32 %v253, %v279
    %v288 = vmul.f32 %v280, 1.442695
    %v289 = vpow.pop %v288
    %v290 = vmul.f32 %v281, 1.442695
    %v291 = vpow.pop %v290
    %v292 = vmul.f32 %v282, 1.442695
    %v293 = vpow.pop %v292
    %v294 = vmul.f32 %v283, 1.442695
    %v295 = vpow.pop %v294
    %v296 = vmul.f32 %v284, 1.442695
    %v297 = vpow.pop %v296
    %v298 = vmul.f32 %v285, 1.442695
    %v299 = vpow.pop %v298
    %v300 = vmul.f32 %v286, 1.442695
    %v301 = vpow.pop %v300
    %v302 = vmul.f32 %v287, 1.442695
    %v303 = vpow.pop %v302
    %v304 = vsel %vm255, %v289, 0.0
    %305 = vadd.xlane.f32.xlu0 %v304
    %v306 = vpop.xlane.xlu0 %305
    %v307 = vsel %vm255, %v291, 0.0
    %308 = vadd.xlane.f32.xlu0 %v307
    %v309 = vpop.xlane.xlu0 %308
    %v310 = vsel %vm255, %v293, 0.0
    %311 = vadd.xlane.f32.xlu0 %v310
    %v312 = vpop.xlane.xlu0 %311
    %v313 = vsel %vm255, %v295, 0.0
    %314 = vadd.xlane.f32.xlu0 %v313
    %v315 = vpop.xlane.xlu0 %314
    %v316 = vsel %vm255, %v297, 0.0
    %317 = vadd.xlane.f32.xlu0 %v316
    %v318 = vpop.xlane.xlu0 %317
    %v319 = vsel %vm255, %v299, 0.0
    %320 = vadd.xlane.f32.xlu0 %v319
    %v321 = vpop.xlane.xlu0 %320
    %v322 = vsel %vm255, %v301, 0.0
    %323 = vadd.xlane.f32.xlu0 %v322
    %v324 = vpop.xlane.xlu0 %323
    %v325 = vsel %vm255, %v303, 0.0
    %326 = vadd.xlane.f32.xlu0 %v325
    %v327 = vpop.xlane.xlu0 %326
    %v328 = vrcp.pop %v306
    %v329 = vrcp.pop %v309
    %v330 = vrcp.pop %v312
    %v331 = vrcp.pop %v315
    %v332 = vrcp.pop %v318
    %v333 = vrcp.pop %v321
    %v334 = vrcp.pop %v324
    %v335 = vrcp.pop %v327
    %v336 = vmul.f32 %v289, %v328
    %v337 = vmul.f32 %v291, %v329
    %v338 = vmul.f32 %v293, %v330
    %v339 = vmul.f32 %v295, %v331
    %v340 = vmul.f32 %v297, %v332
    %v341 = vmul.f32 %v299, %v333
    %v342 = vmul.f32 %v301, %v334
    %v343 = vmul.f32 %v303, %v335
    %v344 = vpack.c.bf16 %v336, %v336
    %v345 = vpack.c.bf16 %v337, %v337
    %v346 = vpack.c.bf16 %v338, %v338
    %v347 = vpack.c.bf16 %v339, %v339
    %v348 = vpack.c.bf16 %v340, %v340
    %v349 = vpack.c.bf16 %v341, %v341
    %v350 = vpack.c.bf16 %v342, %v342
    %v351 = vpack.c.bf16 %v343, %v343
    %v354 = vunpack.c.l.b16 %v344
    %v355 = vunpack.c.l.b16 %v345
    %v356 = vpack.c.b16 %v355, %v354
    %357 = vrot.lane.b32.xlu0 %v150, 64
    %v358 = vpop.permute.xlu0 %357
    %v361 = vsel %vm255, %v356, 0
    %363 = vmatpush.bf16.msra.mxu0 0
    %364 = vmatpush.bf16.msra.mxu0 0
    %365 = vmatpush.bf16.msra.mxu0 0
    %366 = vmatpush.bf16.msra.mxu0 0
    %367 = vmatpush.bf16.msra.mxu0 0
    %368 = vmatpush.bf16.msra.mxu0 0
    %369 = vmatpush.bf16.msra.mxu0 0
    %370 = vmatpush.bf16.msra.mxu0 %v358
    %371 = vmatmul.bf16.gmra.mxu0 %v361
    %v372 = vpop.f32.mrf.mxu0
    %v373 = vadd.f32 0.0, %v372
    %v374 = vpop.f32.mrf.mxu0
    %v375 = vadd.f32 0.0, %v374
    %376 = vdwg.mxu0
    %v379 = vunpack.c.l.b16 %v346
    %v380 = vunpack.c.l.b16 %v347
    %v381 = vpack.c.b16 %v380, %v379
    %382 = vrot.lane.b32.xlu0 %v178, 64
    %v383 = vpop.permute.xlu0 %382
    %v386 = vsel %vm255, %v381, 0
    %388 = vmatpush.bf16.msra.mxu0 0
    %389 = vmatpush.bf16.msra.mxu0 0
    %390 = vmatpush.bf16.msra.mxu0 0
    %391 = vmatpush.bf16.msra.mxu0 0
    %392 = vmatpush.bf16.msra.mxu0 0
    %393 = vmatpush.bf16.msra.mxu0 0
    %394 = vmatpush.bf16.msra.mxu0 0
    %395 = vmatpush.bf16.msra.mxu0 %v383
    %396 = vmatmul.bf16.gmra.mxu0 %v386
    %v397 = vpop.f32.mrf.mxu0
    %v398 = vadd.f32 0.0, %v397
    %v399 = vpop.f32.mrf.mxu0
    %v400 = vadd.f32 0.0, %v399
    %401 = vdwg.mxu0
    %v404 = vunpack.c.l.b16 %v348
    %v405 = vunpack.c.l.b16 %v349
    %v406 = vpack.c.b16 %v405, %v404
    %407 = vrot.lane.b32.xlu0 %v205, 64
    %v408 = vpop.permute.xlu0 %407
    %v411 = vsel %vm255, %v406, 0
    %413 = vmatpush.bf16.msra.mxu0 0
    %414 = vmatpush.bf16.msra.mxu0 0
    %415 = vmatpush.bf16.msra.mxu0 0
    %416 = vmatpush.bf16.msra.mxu0 0
    %417 = vmatpush.bf16.msra.mxu0 0
    %418 = vmatpush.bf16.msra.mxu0 0
    %419 = vmatpush.bf16.msra.mxu0 0
    %420 = vmatpush.bf16.msra.mxu0 %v408
    %421 = vmatmul.bf16.gmra.mxu0 %v411
    %v422 = vpop.f32.mrf.mxu0
    %v423 = vadd.f32 0.0, %v422
    %v424 = vpop.f32.mrf.mxu0
    %v425 = vadd.f32 0.0, %v424
    %426 = vdwg.mxu0
    %v429 = vunpack.c.l.b16 %v350
    %v430 = vunpack.c.l.b16 %v351
    %v431 = vpack.c.b16 %v430, %v429
    %432 = vrot.lane.b32.xlu0 %v232, 64
    %v433 = vpop.permute.xlu0 %432
    %v436 = vsel %vm255, %v431, 0
    %438 = vmatpush.bf16.msra.mxu0 0
    %439 = vmatpush.bf16.msra.mxu0 0
    %440 = vmatpush.bf16.msra.mxu0 0
    %441 = vmatpush.bf16.msra.mxu0 0
    %442 = vmatpush.bf16.msra.mxu0 0
    %443 = vmatpush.bf16.msra.mxu0 0
    %444 = vmatpush.bf16.msra.mxu0 0
    %445 = vmatpush.bf16.msra.mxu0 %v433
    %446 = vmatmul.bf16.gmra.mxu0 %v436
    %v447 = vpop.f32.mrf.mxu0
    %v448 = vadd.f32 0.0, %v447
    %v449 = vpop.f32.mrf.mxu0
    %v450 = vadd.f32 0.0, %v449
    %451 = vdwg.mxu0
    %454 = vrot.lane.b32.xlu0 %v398, 8
    %v455 = vpop.permute.xlu0 %454
    %456 = vrot.lane.b32.xlu0 %v400, 8
    %v457 = vpop.permute.xlu0 %456
    %462 = vrot.lane.b32.xlu0 %v423, 16
    %v463 = vpop.permute.xlu0 %462
    %464 = vrot.lane.b32.xlu0 %v425, 16
    %v465 = vpop.permute.xlu0 %464
    %470 = vrot.lane.b32.xlu0 %v448, 24
    %v471 = vpop.permute.xlu0 %470
    %472 = vrot.lane.b32.xlu0 %v450, 24
    %v473 = vpop.permute.xlu0 %472
    %v476 = vsel %vm153, %v373, %v455
    %v477 = vsel %vm153, %v375, %v457
    %v478 = vsel %vm255, %v476, %v463
    %v479 = vsel %vm255, %v477, %v465
    %vm480 = vcmask 195584
    %v481 = vsel %vm480, %v478, %v471
    %v482 = vsel %vm480, %v479, %v473
    %v483 = vpack.c.bf16 %v482, %v481
    %v484 = vld [vmem:[%s4] sm:$0xf]
    %v485 = vld [vmem:[%s4 + $0x4] sm:$0xf]
    %v486 = vld [vmem:[%s4 + $0x8] sm:$0xf]
    %v487 = vld [vmem:[%s4 + $0xc] sm:$0xf]
    %v492 = vunpack.c.l.b16 %v484
    %v493 = vunpack.c.l.b16 %v485
    %v494 = vunpack.c.l.b16 %v486
    %v495 = vunpack.c.l.b16 %v487
    %v496 = vpack.c.b16 %v493, %v492
    %v497 = vpack.c.b16 %v495, %v494
    %v501 = vsel %vm41, %v483, 0
    %503 = vmatpush.bf16.msra.mxu0 0
    %504 = vmatpush.bf16.msra.mxu0 0
    %505 = vmatpush.bf16.msra.mxu0 0
    %506 = vmatpush.bf16.msra.mxu0 0
    %507 = vmatpush.bf16.msra.mxu0 0
    %508 = vmatpush.bf16.msra.mxu0 0
    %509 = vmatpush.bf16.msra.mxu0 %v497
    %510 = vmatpush.bf16.msra.mxu0 %v496
    %511 = vmatmul.bf16.gmra.mxu0 %v501
    %v512 = vpop.f32.mrf.mxu0
    %v513 = vadd.f32 0.0, %v512
    %v514 = vpop.f32.mrf.mxu0
    %v515 = vadd.f32 0.0, %v514
    %516 = vdwg.mxu0
    %v517 = vadd.f32 %v28, %v513
    %v518 = vadd.f32 %v29, %v515
    %v519 = vld [vmem:[%s2 + $0x1] sm:$0x1]
    %v520 = vmul.f32 %v517, %v517
    %v521 = vmul.f32 %v518, %v518
    %v522 = vsel %vm41, %v520, 0.0
    %523 = vadd.xlane.f32.xlu0 %v522
    %v524 = vpop.xlane.xlu0 %523
    %v525 = vsel %vm41, %v521, 0.0
    %526 = vadd.xlane.f32.xlu0 %v525
    %v527 = vpop.xlane.xlu0 %526
    %v528 = vmul.f32 %v524, %v54
    %v529 = vmul.f32 %v527, %v54
    %v530 = vadd.f32 %v528, 1e-06
    %v531 = vadd.f32 %v529, 1e-06
    %v532 = vrsqrt.pop %v530
    %v533 = vmul.f32 %v532, %v530
    %v534 = vmul.f32 %v533, %v532
    %v535 = vmul.f32 0.5, %v534
    %v536 = vsub.f32 1.5, %v535
    %v537 = vmul.f32 %v532, %v536
    %vm538 = vweird.f32 %v530
    %vm539 = vweird.f32 %v532
    %vm540 = vmor %vm538, %vm539
    %v541 = vsel %vm540, %v532, %v537
    %v542 = vrsqrt.pop %v531
    %v543 = vmul.f32 %v542, %v531
    %v544 = vmul.f32 %v543, %v542
    %v545 = vmul.f32 0.5, %v544
    %v546 = vsub.f32 1.5, %v545
    %v547 = vmul.f32 %v542, %v546
    %vm548 = vweird.f32 %v531
    %vm549 = vweird.f32 %v542
    %vm550 = vmor %vm548, %vm549
    %v551 = vsel %vm550, %v542, %v547
    %v552 = vmul.f32 %v517, %v541
    %v553 = vmul.f32 %v518, %v551
    %v554 = vperm.slane %v519, 0
    %v555 = vmul.f32 %v552, %v554
    %v556 = vmul.f32 %v553, %v554
    %v557 = vpack.c.bf16 %v556, %v555
    %v558 = vld [vmem:[%s5] sm:$0xf]
    %v559 = vld [vmem:[%s5 + $0x4] sm:$0xf]
    %v560 = vld [vmem:[%s5 + $0x8] sm:$0xf]
    %v561 = vld [vmem:[%s5 + $0xc] sm:$0xf]
    %v566 = vunpack.c.l.b16 %v558
    %v567 = vunpack.c.l.b16 %v559
    %v568 = vunpack.c.l.b16 %v560
    %v569 = vunpack.c.l.b16 %v561
    %v570 = vpack.c.b16 %v567, %v566
    %v571 = vpack.c.b16 %v569, %v568
    %v575 = vsel %vm41, %v557, 0
    %577 = vmatpush.bf16.msra.mxu0 0
    %578 = vmatpush.bf16.msra.mxu0 0
    %579 = vmatpush.bf16.msra.mxu0 0
    %580 = vmatpush.bf16.msra.mxu0 0
    %581 = vmatpush.bf16.msra.mxu0 0
    %582 = vmatpush.bf16.msra.mxu0 0
    %583 = vmatpush.bf16.msra.mxu0 %v571
    %584 = vmatpush.bf16.msra.mxu0 %v570
    %585 = vmatmul.bf16.gmra.mxu0 %v575
    %v586 = vpop.f32.mrf.mxu0
    %v587 = vadd.f32 0.0, %v586
    %v588 = vpop.f32.mrf.mxu0
    %v589 = vadd.f32 0.0, %v588
    %590 = vdwg.mxu0
    %v591 = vmul.f32 %v587, 0.5
    %v592 = vmul.f32 %v589, 0.5
    %v593 = vmul.f32 %v587, 0.044715
    %v594 = vmul.f32 %v589, 0.044715
    %v595 = vmul.f32 %v593, %v587
    %v596 = vmul.f32 %v594, %v589
    %v597 = vmul.f32 %v595, %v587
    %v598 = vmul.f32 %v596, %v589
    %v599 = vadd.f32 %v587, %v597
    %v600 = vadd.f32 %v589, %v598
    %v601 = vmul.f32 %v599, 0.7978846
    %v602 = vmul.f32 %v600, 0.7978846
    %v603 = vtanh.pop %v601
    %v604 = vtanh.pop %v602
    %v605 = vadd.f32 %v603, 1.0
    %v606 = vadd.f32 %v604, 1.0
    %v607 = vmul.f32 %v591, %v605
    %v608 = vmul.f32 %v592, %v606
    %611 = vrot.lane.b32.xlu0 %v587, 64
    %v612 = vpop.permute.xlu0 %611
    %613 = vrot.lane.b32.xlu0 %v589, 64
    %v614 = vpop.permute.xlu0 %613
    %v617 = vmul.f32 %v607, %v612
    %v618 = vmul.f32 %v608, %v614
    %v619 = vpack.c.bf16 %v618, %v617
    %v620 = vld [vmem:[%s6] sm:$0xf]
    %v621 = vld [vmem:[%s6 + $0x4] sm:$0xf]
    %v622 = vld [vmem:[%s6 + $0x8] sm:$0xf]
    %v623 = vld [vmem:[%s6 + $0xc] sm:$0xf]
    %v624 = vld [vmem:[%s6 + $0x10] sm:$0xf]
    %v625 = vld [vmem:[%s6 + $0x14] sm:$0xf]
    %v626 = vld [vmem:[%s6 + $0x18] sm:$0xf]
    %v627 = vld [vmem:[%s6 + $0x1c] sm:$0xf]
    %v636 = vunpack.c.l.b16 %v620
    %v637 = vunpack.c.l.b16 %v621
    %v638 = vunpack.c.l.b16 %v622
    %v639 = vunpack.c.l.b16 %v623
    %v640 = vunpack.c.l.b16 %v624
    %v641 = vunpack.c.l.b16 %v625
    %v642 = vunpack.c.l.b16 %v626
    %v643 = vunpack.c.l.b16 %v627
    %v644 = vpack.c.b16 %v637, %v636
    %v645 = vpack.c.b16 %v639, %v638
    %v646 = vpack.c.b16 %v641, %v640
    %v647 = vpack.c.b16 %v643, %v642
    %vm652 = vcmask 523264
    %v654 = vsel %vm652, %v619, 0
    %656 = vmatpush.bf16.msra.mxu0 0
    %657 = vmatpush.bf16.msra.mxu0 0
    %658 = vmatpush.bf16.msra.mxu0 0
    %659 = vmatpush.bf16.msra.mxu0 0
    %660 = vmatpush.bf16.msra.mxu0 %v647
    %661 = vmatpush.bf16.msra.mxu0 %v646
    %662 = vmatpush.bf16.msra.mxu0 %v645
    %663 = vmatpush.bf16.msra.mxu0 %v644
    %664 = vmatmul.bf16.gmra.mxu0 %v654
    %v665 = vpop.f32.mrf.mxu0
    %v666 = vadd.f32 0.0, %v665
    %v667 = vpop.f32.mrf.mxu0
    %v668 = vadd.f32 0.0, %v667
    %669 = vdwg.mxu0
    %v670 = vadd.f32 %v517, %v666
    %v671 = vadd.f32 %v518, %v668
    %v672 = vld [vmem:[%s2 + $0x2] sm:$0x1]
    %v673 = vmul.f32 %v670, %v670
    %v674 = vmul.f32 %v671, %v671
    %v675 = vsel %vm41, %v673, 0.0
    %676 = vadd.xlane.f32.xlu0 %v675
    %v677 = vpop.xlane.xlu0 %676
    %v678 = vsel %vm41, %v674, 0.0
    %679 = vadd.xlane.f32.xlu0 %v678
    %v680 = vpop.xlane.xlu0 %679
    %v681 = vmul.f32 %v677, %v54
    %v682 = vmul.f32 %v680, %v54
    %v683 = vadd.f32 %v681, 1e-06
    %v684 = vadd.f32 %v682, 1e-06
    %v685 = vrsqrt.pop %v683
    %v686 = vmul.f32 %v685, %v683
    %v687 = vmul.f32 %v686, %v685
    %v688 = vmul.f32 0.5, %v687
    %v689 = vsub.f32 1.5, %v688
    %v690 = vmul.f32 %v685, %v689
    %vm691 = vweird.f32 %v683
    %vm692 = vweird.f32 %v685
    %vm693 = vmor %vm691, %vm692
    %v694 = vsel %vm693, %v685, %v690
    %v695 = vrsqrt.pop %v684
    %v696 = vmul.f32 %v695, %v684
    %v697 = vmul.f32 %v696, %v695
    %v698 = vmul.f32 0.5, %v697
    %v699 = vsub.f32 1.5, %v698
    %v700 = vmul.f32 %v695, %v699
    %vm701 = vweird.f32 %v684
    %vm702 = vweird.f32 %v695
    %vm703 = vmor %vm701, %vm702
    %v704 = vsel %vm703, %v695, %v700
    %v705 = vmul.f32 %v670, %v694
    %v706 = vmul.f32 %v671, %v704
    %v707 = vperm.slane %v672, 0
    %v708 = vmul.f32 %v705, %v707
    %v709 = vmul.f32 %v706, %v707
    %v710 = vpack.c.bf16 %v709, %v708
    %s711 = scalar_lea.vmem %s3, 16
    %v712 = vld [vmem:[%s711] sm:$0xf]
    %v713 = vld [vmem:[%s711 + $0x4] sm:$0xf]
    %v714 = vld [vmem:[%s711 + $0x8] sm:$0xf]
    %v715 = vld [vmem:[%s711 + $0xc] sm:$0xf]
    %v720 = vunpack.c.l.b16 %v712
    %v721 = vunpack.c.l.b16 %v713
    %v722 = vunpack.c.l.b16 %v714
    %v723 = vunpack.c.l.b16 %v715
    %v724 = vpack.c.b16 %v721, %v720
    %v725 = vpack.c.b16 %v723, %v722
    %v729 = vsel %vm41, %v710, 0
    %731 = vmatpush.bf16.msra.mxu0 0
    %732 = vmatpush.bf16.msra.mxu0 0
    %733 = vmatpush.bf16.msra.mxu0 0
    %734 = vmatpush.bf16.msra.mxu0 0
    %735 = vmatpush.bf16.msra.mxu0 0
    %736 = vmatpush.bf16.msra.mxu0 0
    %737 = vmatpush.bf16.msra.mxu0 %v725
    %738 = vmatpush.bf16.msra.mxu0 %v724
    %739 = vmatmul.bf16.gmra.mxu0 %v729
    %v740 = vpop.f32.mrf.mxu0
    %v741 = vadd.f32 0.0, %v740
    %v742 = vpop.f32.mrf.mxu0
    %v743 = vadd.f32 0.0, %v742
    %744 = vdwg.mxu0
    %747 = vrot.lane.b32.xlu0 %v741, 120
    %v748 = vpop.permute.xlu0 %747
    %749 = vrot.lane.b32.xlu0 %v743, 120
    %v750 = vpop.permute.xlu0 %749
    %753 = vrot.lane.b32.xlu0 %v741, 112
    %v754 = vpop.permute.xlu0 %753
    %755 = vrot.lane.b32.xlu0 %v743, 112
    %v756 = vpop.permute.xlu0 %755
    %759 = vrot.lane.b32.xlu0 %v741, 104
    %v760 = vpop.permute.xlu0 %759
    %761 = vrot.lane.b32.xlu0 %v743, 104
    %v762 = vpop.permute.xlu0 %761
    %v765 = vpack.c.bf16 %v741, %v741
    %v766 = vpack.c.bf16 %v743, %v743
    %v767 = vpack.c.bf16 %v748, %v748
    %v768 = vpack.c.bf16 %v750, %v750
    %v769 = vpack.c.bf16 %v754, %v754
    %v770 = vpack.c.bf16 %v756, %v756
    %v771 = vpack.c.bf16 %v760, %v760
    %v772 = vpack.c.bf16 %v762, %v762
    %v775 = vunpack.c.l.b16 %v765
    %v776 = vunpack.c.l.b16 %v766
    %v777 = vpack.c.b16 %v776, %v775
    %778 = vrot.lane.b32.xlu0 %v777, 96
    %v779 = vpop.permute.xlu0 %778
    %v781 = vsel %vm153, %v777, 0
    %v784 = vsel %vm153, %v779, 0
    %786 = vmatpush.bf16.xpose.msra.mxu0 0
    %787 = vmatpush.bf16.xpose.msra.mxu0 0
    %788 = vmatpush.bf16.xpose.msra.mxu0 0
    %789 = vmatpush.bf16.xpose.msra.mxu0 0
    %790 = vmatpush.bf16.xpose.msra.mxu0 0
    %791 = vmatpush.bf16.xpose.msra.mxu0 0
    %792 = vmatpush.bf16.xpose.msra.mxu0 0
    %793 = vmatpush.bf16.xpose.msra.mxu0 %v784
    %794 = vmatmul.bf16.gmra.mxu0 %v781
    %v795 = vpop.f32.mrf.mxu0
    %v796 = vadd.f32 %v30, %v795
    %v797 = vpop.f32.mrf.mxu0
    %v798 = vadd.f32 %v31, %v797
    %799 = vdwg.mxu0
    %v802 = vunpack.c.l.b16 %v767
    %v803 = vunpack.c.l.b16 %v768
    %v804 = vpack.c.b16 %v803, %v802
    %805 = vrot.lane.b32.xlu0 %v804, 96
    %v806 = vpop.permute.xlu0 %805
    %v808 = vsel %vm153, %v804, 0
    %v811 = vsel %vm153, %v806, 0
    %813 = vmatpush.bf16.xpose.msra.mxu0 0
    %814 = vmatpush.bf16.xpose.msra.mxu0 0
    %815 = vmatpush.bf16.xpose.msra.mxu0 0
    %816 = vmatpush.bf16.xpose.msra.mxu0 0
    %817 = vmatpush.bf16.xpose.msra.mxu0 0
    %818 = vmatpush.bf16.xpose.msra.mxu0 0
    %819 = vmatpush.bf16.xpose.msra.mxu0 0
    %820 = vmatpush.bf16.xpose.msra.mxu0 %v811
    %821 = vmatmul.bf16.gmra.mxu0 %v808
    %v822 = vpop.f32.mrf.mxu0
    %v823 = vadd.f32 %v32, %v822
    %v824 = vpop.f32.mrf.mxu0
    %v825 = vadd.f32 %v33, %v824
    %826 = vdwg.mxu0
    %v829 = vunpack.c.l.b16 %v769
    %v830 = vunpack.c.l.b16 %v770
    %v831 = vpack.c.b16 %v830, %v829
    %832 = vrot.lane.b32.xlu0 %v831, 96
    %v833 = vpop.permute.xlu0 %832
    %v835 = vsel %vm153, %v831, 0
    %v838 = vsel %vm153, %v833, 0
    %840 = vmatpush.bf16.xpose.msra.mxu0 0
    %841 = vmatpush.bf16.xpose.msra.mxu0 0
    %842 = vmatpush.bf16.xpose.msra.mxu0 0
    %843 = vmatpush.bf16.xpose.msra.mxu0 0
    %844 = vmatpush.bf16.xpose.msra.mxu0 0
    %845 = vmatpush.bf16.xpose.msra.mxu0 0
    %846 = vmatpush.bf16.xpose.msra.mxu0 0
    %847 = vmatpush.bf16.xpose.msra.mxu0 %v838
    %848 = vmatmul.bf16.gmra.mxu0 %v835
    %v849 = vpop.f32.mrf.mxu0
    %v850 = vadd.f32 %v34, %v849
    %v851 = vpop.f32.mrf.mxu0
    %v852 = vadd.f32 %v35, %v851
    %853 = vdwg.mxu0
    %v856 = vunpack.c.l.b16 %v771
    %v857 = vunpack.c.l.b16 %v772
    %v858 = vpack.c.b16 %v857, %v856
    %859 = vrot.lane.b32.xlu0 %v858, 96
    %v860 = vpop.permute.xlu0 %859
    %v862 = vsel %vm153, %v858, 0
    %v865 = vsel %vm153, %v860, 0
    %867 = vmatpush.bf16.xpose.msra.mxu0 0
    %868 = vmatpush.bf16.xpose.msra.mxu0 0
    %869 = vmatpush.bf16.xpose.msra.mxu0 0
    %870 = vmatpush.bf16.xpose.msra.mxu0 0
    %871 = vmatpush.bf16.xpose.msra.mxu0 0
    %872 = vmatpush.bf16.xpose.msra.mxu0 0
    %873 = vmatpush.bf16.xpose.msra.mxu0 0
    %874 = vmatpush.bf16.xpose.msra.mxu0 %v865
    %875 = vmatmul.bf16.gmra.mxu0 %v862
    %v876 = vpop.f32.mrf.mxu0
    %v877 = vadd.f32 %v36, %v876
    %v878 = vpop.f32.mrf.mxu0
    %v879 = vadd.f32 %v37, %v878
    %880 = vdwg.mxu0
    %v881 = vsel %vm255, %v796, -inf
    %882 = vmax.xlane.f32.xlu0 %v881
    %v883 = vpop.xlane.xlu0 %882
    %v884 = vsel %vm255, %v798, -inf
    %885 = vmax.xlane.f32.xlu0 %v884
    %v886 = vpop.xlane.xlu0 %885
    %v887 = vsel %vm255, %v823, -inf
    %888 = vmax.xlane.f32.xlu0 %v887
    %v889 = vpop.xlane.xlu0 %888
    %v890 = vsel %vm255, %v825, -inf
    %891 = vmax.xlane.f32.xlu0 %v890
    %v892 = vpop.xlane.xlu0 %891
    %v893 = vsel %vm255, %v850, -inf
    %894 = vmax.xlane.f32.xlu0 %v893
    %v895 = vpop.xlane.xlu0 %894
    %v896 = vsel %vm255, %v852, -inf
    %897 = vmax.xlane.f32.xlu0 %v896
    %v898 = vpop.xlane.xlu0 %897
    %v899 = vsel %vm255, %v877, -inf
    %900 = vmax.xlane.f32.xlu0 %v899
    %v901 = vpop.xlane.xlu0 %900
    %v902 = vsel %vm255, %v879, -inf
    %903 = vmax.xlane.f32.xlu0 %v902
    %v904 = vpop.xlane.xlu0 %903
    %v905 = vsub.f32 %v796, %v883
    %v906 = vsub.f32 %v798, %v886
    %v907 = vsub.f32 %v823, %v889
    %v908 = vsub.f32 %v825, %v892
    %v909 = vsub.f32 %v850, %v895
    %v910 = vsub.f32 %v852, %v898
    %v911 = vsub.f32 %v877, %v901
    %v912 = vsub.f32 %v879, %v904
    %v913 = vmul.f32 %v905, 1.442695
    %v914 = vpow.pop %v913
    %v915 = vmul.f32 %v906, 1.442695
    %v916 = vpow.pop %v915
    %v917 = vmul.f32 %v907, 1.442695
    %v918 = vpow.pop %v917
    %v919 = vmul.f32 %v908, 1.442695
    %v920 = vpow.pop %v919
    %v921 = vmul.f32 %v909, 1.442695
    %v922 = vpow.pop %v921
    %v923 = vmul.f32 %v910, 1.442695
    %v924 = vpow.pop %v923
    %v925 = vmul.f32 %v911, 1.442695
    %v926 = vpow.pop %v925
    %v927 = vmul.f32 %v912, 1.442695
    %v928 = vpow.pop %v927
    %v929 = vsel %vm255, %v914, 0.0
    %930 = vadd.xlane.f32.xlu0 %v929
    %v931 = vpop.xlane.xlu0 %930
    %v932 = vsel %vm255, %v916, 0.0
    %933 = vadd.xlane.f32.xlu0 %v932
    %v934 = vpop.xlane.xlu0 %933
    %v935 = vsel %vm255, %v918, 0.0
    %936 = vadd.xlane.f32.xlu0 %v935
    %v937 = vpop.xlane.xlu0 %936
    %v938 = vsel %vm255, %v920, 0.0
    %939 = vadd.xlane.f32.xlu0 %v938
    %v940 = vpop.xlane.xlu0 %939
    %v941 = vsel %vm255, %v922, 0.0
    %942 = vadd.xlane.f32.xlu0 %v941
    %v943 = vpop.xlane.xlu0 %942
    %v944 = vsel %vm255, %v924, 0.0
    %945 = vadd.xlane.f32.xlu0 %v944
    %v946 = vpop.xlane.xlu0 %945
    %v947 = vsel %vm255, %v926, 0.0
    %948 = vadd.xlane.f32.xlu0 %v947
    %v949 = vpop.xlane.xlu0 %948
    %v950 = vsel %vm255, %v928, 0.0
    %951 = vadd.xlane.f32.xlu0 %v950
    %v952 = vpop.xlane.xlu0 %951
    %v953 = vrcp.pop %v931
    %v954 = vrcp.pop %v934
    %v955 = vrcp.pop %v937
    %v956 = vrcp.pop %v940
    %v957 = vrcp.pop %v943
    %v958 = vrcp.pop %v946
    %v959 = vrcp.pop %v949
    %v960 = vrcp.pop %v952
    %v961 = vmul.f32 %v914, %v953
    %v962 = vmul.f32 %v916, %v954
    %v963 = vmul.f32 %v918, %v955
    %v964 = vmul.f32 %v920, %v956
    %v965 = vmul.f32 %v922, %v957
    %v966 = vmul.f32 %v924, %v958
    %v967 = vmul.f32 %v926, %v959
    %v968 = vmul.f32 %v928, %v960
    %v969 = vpack.c.bf16 %v961, %v961
    %v970 = vpack.c.bf16 %v962, %v962
    %v971 = vpack.c.bf16 %v963, %v963
    %v972 = vpack.c.bf16 %v964, %v964
    %v973 = vpack.c.bf16 %v965, %v965
    %v974 = vpack.c.bf16 %v966, %v966
    %v975 = vpack.c.bf16 %v967, %v967
    %v976 = vpack.c.bf16 %v968, %v968
    %v979 = vunpack.c.l.b16 %v969
    %v980 = vunpack.c.l.b16 %v970
    %v981 = vpack.c.b16 %v980, %v979
    %982 = vrot.lane.b32.xlu0 %v777, 64
    %v983 = vpop.permute.xlu0 %982
    %v986 = vsel %vm255, %v981, 0
    %988 = vmatpush.bf16.msra.mxu0 0
    %989 = vmatpush.bf16.msra.mxu0 0
    %990 = vmatpush.bf16.msra.mxu0 0
    %991 = vmatpush.bf16.msra.mxu0 0
    %992 = vmatpush.bf16.msra.mxu0 0
    %993 = vmatpush.bf16.msra.mxu0 0
    %994 = vmatpush.bf16.msra.mxu0 0
    %995 = vmatpush.bf16.msra.mxu0 %v983
    %996 = vmatmul.bf16.gmra.mxu0 %v986
    %v997 = vpop.f32.mrf.mxu0
    %v998 = vadd.f32 0.0, %v997
    %v999 = vpop.f32.mrf.mxu0
    %v1000 = vadd.f32 0.0, %v999
    %1001 = vdwg.mxu0
    %v1004 = vunpack.c.l.b16 %v971
    %v1005 = vunpack.c.l.b16 %v972
    %v1006 = vpack.c.b16 %v1005, %v1004
    %1007 = vrot.lane.b32.xlu0 %v804, 64
    %v1008 = vpop.permute.xlu0 %1007
    %v1011 = vsel %vm255, %v1006, 0
    %1013 = vmatpush.bf16.msra.mxu0 0
    %1014 = vmatpush.bf16.msra.mxu0 0
    %1015 = vmatpush.bf16.msra.mxu0 0
    %1016 = vmatpush.bf16.msra.mxu0 0
    %1017 = vmatpush.bf16.msra.mxu0 0
    %1018 = vmatpush.bf16.msra.mxu0 0
    %1019 = vmatpush.bf16.msra.mxu0 0
    %1020 = vmatpush.bf16.msra.mxu0 %v1008
    %1021 = vmatmul.bf16.gmra.mxu0 %v1011
    %v1022 = vpop.f32.mrf.mxu0
    %v1023 = vadd.f32 0.0, %v1022
    %v1024 = vpop.f32.mrf.mxu0
    %v1025 = vadd.f32 0.0, %v1024
    %1026 = vdwg.mxu0
    %v1029 = vunpack.c.l.b16 %v973
    %v1030 = vunpack.c.l.b16 %v974
    %v1031 = vpack.c.b16 %v1030, %v1029
    %1032 = vrot.lane.b32.xlu0 %v831, 64
    %v1033 = vpop.permute.xlu0 %1032
    %v1036 = vsel %vm255, %v1031, 0
    %1038 = vmatpush.bf16.msra.mxu0 0
    %1039 = vmatpush.bf16.msra.mxu0 0
    %1040 = vmatpush.bf16.msra.mxu0 0
    %1041 = vmatpush.bf16.msra.mxu0 0
    %1042 = vmatpush.bf16.msra.mxu0 0
    %1043 = vmatpush.bf16.msra.mxu0 0
    %1044 = vmatpush.bf16.msra.mxu0 0
    %1045 = vmatpush.bf16.msra.mxu0 %v1033
    %1046 = vmatmul.bf16.gmra.mxu0 %v1036
    %v1047 = vpop.f32.mrf.mxu0
    %v1048 = vadd.f32 0.0, %v1047
    %v1049 = vpop.f32.mrf.mxu0
    %v1050 = vadd.f32 0.0, %v1049
    %1051 = vdwg.mxu0
    %v1054 = vunpack.c.l.b16 %v975
    %v1055 = vunpack.c.l.b16 %v976
    %v1056 = vpack.c.b16 %v1055, %v1054
    %1057 = vrot.lane.b32.xlu0 %v858, 64
    %v1058 = vpop.permute.xlu0 %1057
    %v1061 = vsel %vm255, %v1056, 0
    %1063 = vmatpush.bf16.msra.mxu0 0
    %1064 = vmatpush.bf16.msra.mxu0 0
    %1065 = vmatpush.bf16.msra.mxu0 0
    %1066 = vmatpush.bf16.msra.mxu0 0
    %1067 = vmatpush.bf16.msra.mxu0 0
    %1068 = vmatpush.bf16.msra.mxu0 0
    %1069 = vmatpush.bf16.msra.mxu0 0
    %1070 = vmatpush.bf16.msra.mxu0 %v1058
    %1071 = vmatmul.bf16.gmra.mxu0 %v1061
    %v1072 = vpop.f32.mrf.mxu0
    %v1073 = vadd.f32 0.0, %v1072
    %v1074 = vpop.f32.mrf.mxu0
    %v1075 = vadd.f32 0.0, %v1074
    %1076 = vdwg.mxu0
    %1079 = vrot.lane.b32.xlu0 %v1023, 8
    %v1080 = vpop.permute.xlu0 %1079
    %1081 = vrot.lane.b32.xlu0 %v1025, 8
    %v1082 = vpop.permute.xlu0 %1081
    %1087 = vrot.lane.b32.xlu0 %v1048, 16
    %v1088 = vpop.permute.xlu0 %1087
    %1089 = vrot.lane.b32.xlu0 %v1050, 16
    %v1090 = vpop.permute.xlu0 %1089
    %1095 = vrot.lane.b32.xlu0 %v1073, 24
    %v1096 = vpop.permute.xlu0 %1095
    %1097 = vrot.lane.b32.xlu0 %v1075, 24
    %v1098 = vpop.permute.xlu0 %1097
    %v1101 = vsel %vm153, %v998, %v1080
    %v1102 = vsel %vm153, %v1000, %v1082
    %v1103 = vsel %vm255, %v1101, %v1088
    %v1104 = vsel %vm255, %v1102, %v1090
    %v1105 = vsel %vm480, %v1103, %v1096
    %v1106 = vsel %vm480, %v1104, %v1098
    %v1107 = vpack.c.bf16 %v1106, %v1105
    %s1108 = scalar_lea.vmem %s4, 16
    %v1109 = vld [vmem:[%s1108] sm:$0xf]
    %v1110 = vld [vmem:[%s1108 + $0x4] sm:$0xf]
    %v1111 = vld [vmem:[%s1108 + $0x8] sm:$0xf]
    %v1112 = vld [vmem:[%s1108 + $0xc] sm:$0xf]
    %v1117 = vunpack.c.l.b16 %v1109
    %v1118 = vunpack.c.l.b16 %v1110
    %v1119 = vunpack.c.l.b16 %v1111
    %v1120 = vunpack.c.l.b16 %v1112
    %v1121 = vpack.c.b16 %v1118, %v1117
    %v1122 = vpack.c.b16 %v1120, %v1119
    %v1126 = vsel %vm41, %v1107, 0
    %1128 = vmatpush.bf16.msra.mxu0 0
    %1129 = vmatpush.bf16.msra.mxu0 0
    %1130 = vmatpush.bf16.msra.mxu0 0
    %1131 = vmatpush.bf16.msra.mxu0 0
    %1132 = vmatpush.bf16.msra.mxu0 0
    %1133 = vmatpush.bf16.msra.mxu0 0
    %1134 = vmatpush.bf16.msra.mxu0 %v1122
    %1135 = vmatpush.bf16.msra.mxu0 %v1121
    %1136 = vmatmul.bf16.gmra.mxu0 %v1126
    %v1137 = vpop.f32.mrf.mxu0
    %v1138 = vadd.f32 0.0, %v1137
    %v1139 = vpop.f32.mrf.mxu0
    %v1140 = vadd.f32 0.0, %v1139
    %1141 = vdwg.mxu0
    %v1142 = vadd.f32 %v670, %v1138
    %v1143 = vadd.f32 %v671, %v1140
    %v1144 = vld [vmem:[%s2 + $0x3] sm:$0x1]
    %v1145 = vmul.f32 %v1142, %v1142
    %v1146 = vmul.f32 %v1143, %v1143
    %v1147 = vsel %vm41, %v1145, 0.0
    %1148 = vadd.xlane.f32.xlu0 %v1147
    %v1149 = vpop.xlane.xlu0 %1148
    %v1150 = vsel %vm41, %v1146, 0.0
    %1151 = vadd.xlane.f32.xlu0 %v1150
    %v1152 = vpop.xlane.xlu0 %1151
    %v1153 = vmul.f32 %v1149, %v54
    %v1154 = vmul.f32 %v1152, %v54
    %v1155 = vadd.f32 %v1153, 1e-06
    %v1156 = vadd.f32 %v1154, 1e-06
    %v1157 = vrsqrt.pop %v1155
    %v1158 = vmul.f32 %v1157, %v1155
    %v1159 = vmul.f32 %v1158, %v1157
    %v1160 = vmul.f32 0.5, %v1159
    %v1161 = vsub.f32 1.5, %v1160
    %v1162 = vmul.f32 %v1157, %v1161
    %vm1163 = vweird.f32 %v1155
    %vm1164 = vweird.f32 %v1157
    %vm1165 = vmor %vm1163, %vm1164
    %v1166 = vsel %vm1165, %v1157, %v1162
    %v1167 = vrsqrt.pop %v1156
    %v1168 = vmul.f32 %v1167, %v1156
    %v1169 = vmul.f32 %v1168, %v1167
    %v1170 = vmul.f32 0.5, %v1169
    %v1171 = vsub.f32 1.5, %v1170
    %v1172 = vmul.f32 %v1167, %v1171
    %vm1173 = vweird.f32 %v1156
    %vm1174 = vweird.f32 %v1167
    %vm1175 = vmor %vm1173, %vm1174
    %v1176 = vsel %vm1175, %v1167, %v1172
    %v1177 = vmul.f32 %v1142, %v1166
    %v1178 = vmul.f32 %v1143, %v1176
    %v1179 = vperm.slane %v1144, 0
    %v1180 = vmul.f32 %v1177, %v1179
    %v1181 = vmul.f32 %v1178, %v1179
    %v1182 = vpack.c.bf16 %v1181, %v1180
    %s1183 = scalar_lea.vmem %s5, 16
    %v1184 = vld [vmem:[%s1183] sm:$0xf]
    %v1185 = vld [vmem:[%s1183 + $0x4] sm:$0xf]
    %v1186 = vld [vmem:[%s1183 + $0x8] sm:$0xf]
    %v1187 = vld [vmem:[%s1183 + $0xc] sm:$0xf]
    %v1192 = vunpack.c.l.b16 %v1184
    %v1193 = vunpack.c.l.b16 %v1185
    %v1194 = vunpack.c.l.b16 %v1186
    %v1195 = vunpack.c.l.b16 %v1187
    %v1196 = vpack.c.b16 %v1193, %v1192
    %v1197 = vpack.c.b16 %v1195, %v1194
    %v1201 = vsel %vm41, %v1182, 0
    %1203 = vmatpush.bf16.msra.mxu0 0
    %1204 = vmatpush.bf16.msra.mxu0 0
    %1205 = vmatpush.bf16.msra.mxu0 0
    %1206 = vmatpush.bf16.msra.mxu0 0
    %1207 = vmatpush.bf16.msra.mxu0 0
    %1208 = vmatpush.bf16.msra.mxu0 0
    %1209 = vmatpush.bf16.msra.mxu0 %v1197
    %1210 = vmatpush.bf16.msra.mxu0 %v1196
    %1211 = vmatmul.bf16.gmra.mxu0 %v1201
    %v1212 = vpop.f32.mrf.mxu0
    %v1213 = vadd.f32 0.0, %v1212
    %v1214 = vpop.f32.mrf.mxu0
    %v1215 = vadd.f32 0.0, %v1214
    %1216 = vdwg.mxu0
    %v1217 = vmul.f32 %v1213, 0.5
    %v1218 = vmul.f32 %v1215, 0.5
    %v1219 = vmul.f32 %v1213, 0.044715
    %v1220 = vmul.f32 %v1215, 0.044715
    %v1221 = vmul.f32 %v1219, %v1213
    %v1222 = vmul.f32 %v1220, %v1215
    %v1223 = vmul.f32 %v1221, %v1213
    %v1224 = vmul.f32 %v1222, %v1215
    %v1225 = vadd.f32 %v1213, %v1223
    %v1226 = vadd.f32 %v1215, %v1224
    %v1227 = vmul.f32 %v1225, 0.7978846
    %v1228 = vmul.f32 %v1226, 0.7978846
    %v1229 = vtanh.pop %v1227
    %v1230 = vtanh.pop %v1228
    %v1231 = vadd.f32 %v1229, 1.0
    %v1232 = vadd.f32 %v1230, 1.0
    %v1233 = vmul.f32 %v1217, %v1231
    %v1234 = vmul.f32 %v1218, %v1232
    %1237 = vrot.lane.b32.xlu0 %v1213, 64
    %v1238 = vpop.permute.xlu0 %1237
    %1239 = vrot.lane.b32.xlu0 %v1215, 64
    %v1240 = vpop.permute.xlu0 %1239
    %v1243 = vmul.f32 %v1233, %v1238
    %v1244 = vmul.f32 %v1234, %v1240
    %v1245 = vpack.c.bf16 %v1244, %v1243
    %s1246 = scalar_lea.vmem %s6, 32
    %v1247 = vld [vmem:[%s1246] sm:$0xf]
    %v1248 = vld [vmem:[%s1246 + $0x4] sm:$0xf]
    %v1249 = vld [vmem:[%s1246 + $0x8] sm:$0xf]
    %v1250 = vld [vmem:[%s1246 + $0xc] sm:$0xf]
    %v1251 = vld [vmem:[%s1246 + $0x10] sm:$0xf]
    %v1252 = vld [vmem:[%s1246 + $0x14] sm:$0xf]
    %v1253 = vld [vmem:[%s1246 + $0x18] sm:$0xf]
    %v1254 = vld [vmem:[%s1246 + $0x1c] sm:$0xf]
    %v1263 = vunpack.c.l.b16 %v1247
    %v1264 = vunpack.c.l.b16 %v1248
    %v1265 = vunpack.c.l.b16 %v1249
    %v1266 = vunpack.c.l.b16 %v1250
    %v1267 = vunpack.c.l.b16 %v1251
    %v1268 = vunpack.c.l.b16 %v1252
    %v1269 = vunpack.c.l.b16 %v1253
    %v1270 = vunpack.c.l.b16 %v1254
    %v1271 = vpack.c.b16 %v1264, %v1263
    %v1272 = vpack.c.b16 %v1266, %v1265
    %v1273 = vpack.c.b16 %v1268, %v1267
    %v1274 = vpack.c.b16 %v1270, %v1269
    %v1280 = vsel %vm652, %v1245, 0
    %1282 = vmatpush.bf16.msra.mxu0 0
    %1283 = vmatpush.bf16.msra.mxu0 0
    %1284 = vmatpush.bf16.msra.mxu0 0
    %1285 = vmatpush.bf16.msra.mxu0 0
    %1286 = vmatpush.bf16.msra.mxu0 %v1274
    %1287 = vmatpush.bf16.msra.mxu0 %v1273
    %1288 = vmatpush.bf16.msra.mxu0 %v1272
    %1289 = vmatpush.bf16.msra.mxu0 %v1271
    %1290 = vmatmul.bf16.gmra.mxu0 %v1280
    %v1291 = vpop.f32.mrf.mxu0
    %v1292 = vadd.f32 0.0, %v1291
    %v1293 = vpop.f32.mrf.mxu0
    %v1294 = vadd.f32 0.0, %v1293
    %1295 = vdwg.mxu0
    %v1296 = vadd.f32 %v1142, %v1292
    %v1297 = vadd.f32 %v1143, %v1294
    %v1298 = vld [vmem:[%s2 + $0x4] sm:$0x1]
    %v1299 = vmul.f32 %v1296, %v1296
    %v1300 = vmul.f32 %v1297, %v1297
    %v1301 = vsel %vm41, %v1299, 0.0
    %1302 = vadd.xlane.f32.xlu0 %v1301
    %v1303 = vpop.xlane.xlu0 %1302
    %v1304 = vsel %vm41, %v1300, 0.0
    %1305 = vadd.xlane.f32.xlu0 %v1304
    %v1306 = vpop.xlane.xlu0 %1305
    %v1307 = vmul.f32 %v1303, %v54
    %v1308 = vmul.f32 %v1306, %v54
    %v1309 = vadd.f32 %v1307, 1e-06
    %v1310 = vadd.f32 %v1308, 1e-06
    %v1311 = vrsqrt.pop %v1309
    %v1312 = vmul.f32 %v1311, %v1309
    %v1313 = vmul.f32 %v1312, %v1311
    %v1314 = vmul.f32 0.5, %v1313
    %v1315 = vsub.f32 1.5, %v1314
    %v1316 = vmul.f32 %v1311, %v1315
    %vm1317 = vweird.f32 %v1309
    %vm1318 = vweird.f32 %v1311
    %vm1319 = vmor %vm1317, %vm1318
    %v1320 = vsel %vm1319, %v1311, %v1316
    %v1321 = vrsqrt.pop %v1310
    %v1322 = vmul.f32 %v1321, %v1310
    %v1323 = vmul.f32 %v1322, %v1321
    %v1324 = vmul.f32 0.5, %v1323
    %v1325 = vsub.f32 1.5, %v1324
    %v1326 = vmul.f32 %v1321, %v1325
    %vm1327 = vweird.f32 %v1310
    %vm1328 = vweird.f32 %v1321
    %vm1329 = vmor %vm1327, %vm1328
    %v1330 = vsel %vm1329, %v1321, %v1326
    %v1331 = vmul.f32 %v1296, %v1320
    %v1332 = vmul.f32 %v1297, %v1330
    %v1333 = vperm.slane %v1298, 0
    %v1334 = vmul.f32 %v1331, %v1333
    %v1335 = vmul.f32 %v1332, %v1333
    %1336 = vst.msk [vmem:[#allocation2] sm:$0xff] %vm41, %v1334
    %1337 = vst.msk [vmem:[#allocation2 + $0x8] sm:$0xff] %vm41, %v1335
    // Predicated region
    $region30: #{t5_encoder_forward.1} parent=1 // pred_check
      _
    $region31: #{t5_encoder_forward.1} parent=1 // pred_check_branch
      %1339 = sbr.rel (0) target = $region33
    $region32: #{t5_encoder_forward.1} parent=1 // pred_region
      %1341 = vsyncadd [#allocation3], 0
      %s1342 = sshll.u32 [#allocation2], 4
      %s1343 = int_to_ptr.vmem [resolvable:$true] %s1342
      %s1344 = sshll.u32 %s7, 4
      %s1345 = int_to_ptr.hbm [resolvable:$true] %s1344
      %1350 = dma.vmem_to_hbm [thread:$0]  %s1343, 256, %s1345, [#allocation3], 128, 128, 8
    $region33: #{t5_encoder_forward.1} parent=1 // pred_fallthru
      _
    // Predicated region
    $region34: #{t5_encoder_forward.1} parent=1 // pred_check
      _
    $region35: #{t5_encoder_forward.1} parent=1 // pred_check_branch
      %1352 = sbr.rel (0) target = $region37
    $region36: #{t5_encoder_forward.1} parent=1 // pred_region
      %1354 = dma.done [#allocation3], 256
    $region37: #{t5_encoder_forward.1} parent=1 // pred_fallthru
      _
    %1355 = vsyncpa [#allocation3], 1

</llo_original>
